<compile_context>
chip_gen: v7x
topology: tpu7x:2x2x1
jax: 0.10.0
libtpu: 0.0.40
codegen_flags: <defaults>
</compile_context>

<pallas_src>
import functools

import jax
import jax.numpy as jnp
from jax.experimental import pallas as pl
from jax.experimental.pallas import tpu as pltpu

# Branch configs: (kernel_size, padding, dilation). All produce L_out == L_in
# because (k - 1) * dilation == 2 * padding for every branch.
BRANCHES = ((49, 24, 1), (7, 144, 48), (6, 40, 16), (6, 20, 8))
MAX_PAD = max(p for _, p, _ in BRANCHES)      # 144
K_TOTAL = sum(k for k, _, _ in BRANCHES)      # 68


def _tap_starts():
    """Static per-tap start offsets into the MAX_PAD-padded input."""
    starts = []
    for k, pad, dil in BRANCHES:
        off = MAX_PAD - pad
        for t in range(k):
            starts.append(off + t * dil)
    return tuple(starts)


TAP_STARTS = _tap_starts()


def _inception_d_kernel(x_ref, w_ref, b_ref, o_ref, xcat_ref, *, L, Nb):
    # x_ref   : (Nb, C_in, Lp)          padded input batch-block
    # w_ref   : (C_out, K_TOTAL*C_in)   pre-concatenated, spectrally-normalized weights
    # b_ref   : (C_out, 1)              summed branch biases (f32)
    # o_ref   : (1, C_out, Nb*L)        lane-dense output slab
    # xcat_ref: (K_TOTAL*C_in, Nb*L)    VMEM im2col scratch
    c_in = x_ref.shape[1]

    # Build the im2col slab: row block r <- kernel tap r, column block n <- batch
    # element n of this block. All offsets are static; these copies ride the
    # vld/vst slots and pipeline under the single MXU matmul below.
    for r, start in enumerate(TAP_STARTS):
        for n in range(Nb):
            xcat_ref[r * c_in:(r + 1) * c_in, n * L:(n + 1) * L] = (
                x_ref[n, :, start:start + L])

    acc = jnp.dot(w_ref[...], xcat_ref[...], preferred_element_type=jnp.float32)
    o_ref[0] = (acc + b_ref[...]).astype(o_ref.dtype)


def _prep_weights(weights, dtype):
    # (C_out, C_in, K) -> (C_out, K, C_in) -> (C_out, K*C_in), concatenated over
    # branches so columns line up with the im2col row order (tap-major, c_in-minor).
    mats = [jnp.transpose(w, (0, 2, 1)).reshape(w.shape[0], -1) for w in weights]
    return jnp.concatenate(mats, axis=1).astype(dtype)


def inception_d(x, weights, biases, *, compute_dtype=jnp.float32):
    """x: (N, C_in, L) NCL; weights[i]: (C_out, C_in, K_i); biases[i]: (C_out,)."""
    N, C_in, L = x.shape
    C_out = weights[0].shape[0]
    Lp = L + 2 * MAX_PAD
    KC = K_TOTAL * C_in

    # Fold enough batch elements into the lane axis so the output slab is
    # >= 128 lanes wide (lane-dense stores). If L >= 128 already, Nb == 1.
    Nb = max(1, min(N, pl.cdiv(128, L)))
    G = pl.cdiv(N, Nb)
    N_pad = G * Nb

    # Pad once with the maximum padding; per-branch offsets handled in-kernel.
    x_pad = jnp.pad(x, ((0, N_pad - N), (0, 0), (MAX_PAD, MAX_PAD)))
    x_pad = x_pad.astype(compute_dtype)     # bf16 here is a drop-in for v6e/v7x
    w_cat = _prep_weights(weights, compute_dtype)
    b_total = sum(biases).reshape(C_out, 1).astype(jnp.float32)

    # TODO(synk): for production-scale L, additionally tile L with a 2*MAX_PAD
    # halo (gives a second "parallel" grid axis for v7x's 2 TCs) and set
    # vmem_limit_bytes explicitly.

    kern = functools.partial(_inception_d_kernel, L=L, Nb=Nb)
    flops = 2 * N_pad * C_out * KC * L
    bytes_accessed = (x_pad.size * x_pad.dtype.itemsize
                      + w_cat.size * w_cat.dtype.itemsize
                      + b_total.size * 4
                      + N_pad * C_out * L * x.dtype.itemsize)

    out = pl.pallas_call(
        kern,
        out_shape=jax.ShapeDtypeStruct((G, C_out, Nb * L), x.dtype),
        grid=(G,),
        in_specs=[
            pl.BlockSpec((Nb, C_in, Lp), lambda g: (g, 0, 0)),
            pl.BlockSpec((C_out, KC), lambda g: (0, 0)),
            pl.BlockSpec((C_out, 1), lambda g: (0, 0)),
        ],
        out_specs=pl.BlockSpec((1, C_out, Nb * L), lambda g: (g, 0, 0)),
        scratch_shapes=[pltpu.VMEM((KC, Nb * L), compute_dtype)],
        compiler_params=pltpu.CompilerParams(dimension_semantics=("parallel",)),
        cost_estimate=pl.CostEstimate(flops=flops, transcendentals=0,
                                      bytes_accessed=bytes_accessed),
    )(x_pad, w_cat, b_total)

    # (G, C_out, Nb*L) -> (N, C_out, L)
    out = out.reshape(G, C_out, Nb, L).transpose(0, 2, 1, 3).reshape(N_pad, C_out, L)
    return out[:N]


def _spectral_norm(w):
    # Converged spectral norm: divide by the largest singular value of the
    # (C_out, C_in*K) weight matrix (what nn.utils.spectral_norm converges to).
    w_mat = w.reshape(w.shape[0], -1)
    sigma = jnp.linalg.svd(w_mat, compute_uv=False)[0]
    return w / sigma


def _ref_forward(x, weights, biases):
    # Pure-JAX reference (XLA conv) for correctness checking.
    out = 0.0
    for w, b, (k, pad, dil) in zip(weights, biases, BRANCHES):
        y = jax.lax.conv_general_dilated(
            x, w, window_strides=(1,), padding=[(pad, pad)],
            rhs_dilation=(dil,),
            dimension_numbers=("NCH", "OIH", "NCH"),
            precision=jax.lax.Precision.HIGHEST)
        out = out + y + b[None, :, None]
    return out


if __name__ == "__main__":
    N, C_in, C_out, L = 2, 4, 8, 64

    key = jax.random.PRNGKey(0)
    keys = jax.random.split(key, 2 * len(BRANCHES) + 1)

    weights, biases = [], []
    for i, (k, pad, dil) in enumerate(BRANCHES):
        w = jax.random.normal(keys[2 * i], (C_out, C_in, k), jnp.float32) * 0.1
        b = jax.random.normal(keys[2 * i + 1], (C_out,), jnp.float32) * 0.1
        weights.append(_spectral_norm(w))
        biases.append(b)

    x = jax.random.normal(keys[-1], (N, C_in, L), jnp.float32)

    out = inception_d(x, weights, biases)
    out = jax.block_until_ready(out)

    ref = _ref_forward(x, weights, biases)
    assert out.shape == (N, C_out, L)
    assert jnp.allclose(out, ref, atol=1e-2, rtol=1e-2), \
        f"max abs err {jnp.max(jnp.abs(out - ref))}"

    print("KERNEL_OK")
</pallas_src>

<mosaic_0001>
module attributes {stable_mosaic.version = 11 : i64} {
  func.func @_inception_d_kernel(%arg0: i32, %arg1: memref<2x4x352xf32, #tpu.memory_space<vmem>>, %arg2: memref<8x272xf32, #tpu.memory_space<vmem>>, %arg3: memref<8x1xf32, #tpu.memory_space<vmem>>, %arg4: memref<1x8x128xf32, #tpu.memory_space<vmem>>, %arg5: memref<272x128xf32, #tpu.memory_space<vmem>>) attributes {dimension_semantics = [#tpu.dimension_semantics<parallel>], iteration_bounds = array<i64: 1>, scalar_prefetch = 0 : i64, scratch_operands = 1 : i64, tpu.core_type = #tpu.core_type<tc>, window_params = [{transform_indices = @transform_0, window_bounds = array<i64: 2, 4, 352>}, {pipeline_mode = #tpu.pipeline_mode<synchronous>, transform_indices = @transform_1, window_bounds = array<i64: 8, 272>}, {pipeline_mode = #tpu.pipeline_mode<synchronous>, transform_indices = @transform_2, window_bounds = array<i64: 8, 1>}, {transform_indices = @transform_3, window_bounds = array<i64: 1, 8, 128>}]} {
    %c0 = arith.constant 0 : index
    %c0_0 = arith.constant 0 : index
    %c120 = arith.constant 120 : index
    %0 = vector.load %arg1[%c0, %c0_0, %c120] : memref<2x4x352xf32, #tpu.memory_space<vmem>>, vector<1x4x64xf32>
    %1 = vector.shape_cast %0 : vector<1x4x64xf32> to vector<4x64xf32>
    %c0_1 = arith.constant 0 : index
    %c0_2 = arith.constant 0 : index
    %2 = vector.load %arg5[%c0_1, %c0_2] : memref<272x128xf32, #tpu.memory_space<vmem>>, vector<4x64xf32>
    tpu.vector_store %arg5[%c0_1, %c0_2], %1 {strides = array<i32>} : memref<272x128xf32, #tpu.memory_space<vmem>>, vector<4x64xf32>,
    %c1 = arith.constant 1 : index
    %c0_3 = arith.constant 0 : index
    %c120_4 = arith.constant 120 : index
    %3 = vector.load %arg1[%c1, %c0_3, %c120_4] : memref<2x4x352xf32, #tpu.memory_space<vmem>>, vector<1x4x64xf32>
    %4 = vector.shape_cast %3 : vector<1x4x64xf32> to vector<4x64xf32>
    %c0_5 = arith.constant 0 : index
    %c64 = arith.constant 64 : index
    %5 = vector.load %arg5[%c0_5, %c64] : memref<272x128xf32, #tpu.memory_space<vmem>>, vector<4x64xf32>
    tpu.vector_store %arg5[%c0_5, %c64], %4 {strides = array<i32>} : memref<272x128xf32, #tpu.memory_space<vmem>>, vector<4x64xf32>,
    %c0_6 = arith.constant 0 : index
    %c0_7 = arith.constant 0 : index
    %c121 = arith.constant 121 : index
    %6 = vector.load %arg1[%c0_6, %c0_7, %c121] : memref<2x4x352xf32, #tpu.memory_space<vmem>>, vector<1x4x64xf32>
    %7 = vector.shape_cast %6 : vector<1x4x64xf32> to vector<4x64xf32>
    %c4 = arith.constant 4 : index
    %c0_8 = arith.constant 0 : index
    %8 = vector.load %arg5[%c4, %c0_8] : memref<272x128xf32, #tpu.memory_space<vmem>>, vector<4x64xf32>
    tpu.vector_store %arg5[%c4, %c0_8], %7 {strides = array<i32>} : memref<272x128xf32, #tpu.memory_space<vmem>>, vector<4x64xf32>,
    %c1_9 = arith.constant 1 : index
    %c0_10 = arith.constant 0 : index
    %c121_11 = arith.constant 121 : index
    %9 = vector.load %arg1[%c1_9, %c0_10, %c121_11] : memref<2x4x352xf32, #tpu.memory_space<vmem>>, vector<1x4x64xf32>
    %10 = vector.shape_cast %9 : vector<1x4x64xf32> to vector<4x64xf32>
    %c4_12 = arith.constant 4 : index
    %c64_13 = arith.constant 64 : index
    %11 = vector.load %arg5[%c4_12, %c64_13] : memref<272x128xf32, #tpu.memory_space<vmem>>, vector<4x64xf32>
    tpu.vector_store %arg5[%c4_12, %c64_13], %10 {strides = array<i32>} : memref<272x128xf32, #tpu.memory_space<vmem>>, vector<4x64xf32>,
    %c0_14 = arith.constant 0 : index
    %c0_15 = arith.constant 0 : index
    %c122 = arith.constant 122 : index
    %12 = vector.load %arg1[%c0_14, %c0_15, %c122] : memref<2x4x352xf32, #tpu.memory_space<vmem>>, vector<1x4x64xf32>
    %13 = vector.shape_cast %12 : vector<1x4x64xf32> to vector<4x64xf32>
    %c8 = arith.constant 8 : index
    %c0_16 = arith.constant 0 : index
    %14 = vector.load %arg5[%c8, %c0_16] : memref<272x128xf32, #tpu.memory_space<vmem>>, vector<4x64xf32>
    tpu.vector_store %arg5[%c8, %c0_16], %13 {strides = array<i32>} : memref<272x128xf32, #tpu.memory_space<vmem>>, vector<4x64xf32>,
    %c1_17 = arith.constant 1 : index
    %c0_18 = arith.constant 0 : index
    %c122_19 = arith.constant 122 : index
    %15 = vector.load %arg1[%c1_17, %c0_18, %c122_19] : memref<2x4x352xf32, #tpu.memory_space<vmem>>, vector<1x4x64xf32>
    %16 = vector.shape_cast %15 : vector<1x4x64xf32> to vector<4x64xf32>
    %c8_20 = arith.constant 8 : index
    %c64_21 = arith.constant 64 : index
    %17 = vector.load %arg5[%c8_20, %c64_21] : memref<272x128xf32, #tpu.memory_space<vmem>>, vector<4x64xf32>
    tpu.vector_store %arg5[%c8_20, %c64_21], %16 {strides = array<i32>} : memref<272x128xf32, #tpu.memory_space<vmem>>, vector<4x64xf32>,
    %c0_22 = arith.constant 0 : index
    %c0_23 = arith.constant 0 : index
    %c123 = arith.constant 123 : index
    %18 = vector.load %arg1[%c0_22, %c0_23, %c123] : memref<2x4x352xf32, #tpu.memory_space<vmem>>, vector<1x4x64xf32>
    %19 = vector.shape_cast %18 : vector<1x4x64xf32> to vector<4x64xf32>
    %c12 = arith.constant 12 : index
    %c0_24 = arith.constant 0 : index
    %20 = vector.load %arg5[%c12, %c0_24] : memref<272x128xf32, #tpu.memory_space<vmem>>, vector<4x64xf32>
    tpu.vector_store %arg5[%c12, %c0_24], %19 {strides = array<i32>} : memref<272x128xf32, #tpu.memory_space<vmem>>, vector<4x64xf32>,
    %c1_25 = arith.constant 1 : index
    %c0_26 = arith.constant 0 : index
    %c123_27 = arith.constant 123 : index
    %21 = vector.load %arg1[%c1_25, %c0_26, %c123_27] : memref<2x4x352xf32, #tpu.memory_space<vmem>>, vector<1x4x64xf32>
    %22 = vector.shape_cast %21 : vector<1x4x64xf32> to vector<4x64xf32>
    %c12_28 = arith.constant 12 : index
    %c64_29 = arith.constant 64 : index
    %23 = vector.load %arg5[%c12_28, %c64_29] : memref<272x128xf32, #tpu.memory_space<vmem>>, vector<4x64xf32>
    tpu.vector_store %arg5[%c12_28, %c64_29], %22 {strides = array<i32>} : memref<272x128xf32, #tpu.memory_space<vmem>>, vector<4x64xf32>,
    %c0_30 = arith.constant 0 : index
    %c0_31 = arith.constant 0 : index
    %c124 = arith.constant 124 : index
    %24 = vector.load %arg1[%c0_30, %c0_31, %c124] : memref<2x4x352xf32, #tpu.memory_space<vmem>>, vector<1x4x64xf32>
    %25 = vector.shape_cast %24 : vector<1x4x64xf32> to vector<4x64xf32>
    %c16 = arith.constant 16 : index
    %c0_32 = arith.constant 0 : index
    %26 = vector.load %arg5[%c16, %c0_32] : memref<272x128xf32, #tpu.memory_space<vmem>>, vector<4x64xf32>
    tpu.vector_store %arg5[%c16, %c0_32], %25 {strides = array<i32>} : memref<272x128xf32, #tpu.memory_space<vmem>>, vector<4x64xf32>,
    %c1_33 = arith.constant 1 : index
    %c0_34 = arith.constant 0 : index
    %c124_35 = arith.constant 124 : index
    %27 = vector.load %arg1[%c1_33, %c0_34, %c124_35] : memref<2x4x352xf32, #tpu.memory_space<vmem>>, vector<1x4x64xf32>
    %28 = vector.shape_cast %27 : vector<1x4x64xf32> to vector<4x64xf32>
    %c16_36 = arith.constant 16 : index
    %c64_37 = arith.constant 64 : index
    %29 = vector.load %arg5[%c16_36, %c64_37] : memref<272x128xf32, #tpu.memory_space<vmem>>, vector<4x64xf32>
    tpu.vector_store %arg5[%c16_36, %c64_37], %28 {strides = array<i32>} : memref<272x128xf32, #tpu.memory_space<vmem>>, vector<4x64xf32>,
    %c0_38 = arith.constant 0 : index
    %c0_39 = arith.constant 0 : index
    %c125 = arith.constant 125 : index
    %30 = vector.load %arg1[%c0_38, %c0_39, %c125] : memref<2x4x352xf32, #tpu.memory_space<vmem>>, vector<1x4x64xf32>
    %31 = vector.shape_cast %30 : vector<1x4x64xf32> to vector<4x64xf32>
    %c20 = arith.constant 20 : index
    %c0_40 = arith.constant 0 : index
    %32 = vector.load %arg5[%c20, %c0_40] : memref<272x128xf32, #tpu.memory_space<vmem>>, vector<4x64xf32>
    tpu.vector_store %arg5[%c20, %c0_40], %31 {strides = array<i32>} : memref<272x128xf32, #tpu.memory_space<vmem>>, vector<4x64xf32>,
    %c1_41 = arith.constant 1 : index
    %c0_42 = arith.constant 0 : index
    %c125_43 = arith.constant 125 : index
    %33 = vector.load %arg1[%c1_41, %c0_42, %c125_43] : memref<2x4x352xf32, #tpu.memory_space<vmem>>, vector<1x4x64xf32>
    %34 = vector.shape_cast %33 : vector<1x4x64xf32> to vector<4x64xf32>
    %c20_44 = arith.constant 20 : index
    %c64_45 = arith.constant 64 : index
    %35 = vector.load %arg5[%c20_44, %c64_45] : memref<272x128xf32, #tpu.memory_space<vmem>>, vector<4x64xf32>
    tpu.vector_store %arg5[%c20_44, %c64_45], %34 {strides = array<i32>} : memref<272x128xf32, #tpu.memory_space<vmem>>, vector<4x64xf32>,
    %c0_46 = arith.constant 0 : index
    %c0_47 = arith.constant 0 : index
    %c126 = arith.constant 126 : index
    %36 = vector.load %arg1[%c0_46, %c0_47, %c126] : memref<2x4x352xf32, #tpu.memory_space<vmem>>, vector<1x4x64xf32>
    %37 = vector.shape_cast %36 : vector<1x4x64xf32> to vector<4x64xf32>
    %c24 = arith.constant 24 : index
    %c0_48 = arith.constant 0 : index
    %38 = vector.load %arg5[%c24, %c0_48] : memref<272x128xf32, #tpu.memory_space<vmem>>, vector<4x64xf32>
    tpu.vector_store %arg5[%c24, %c0_48], %37 {strides = array<i32>} : memref<272x128xf32, #tpu.memory_space<vmem>>, vector<4x64xf32>,
    %c1_49 = arith.constant 1 : index
    %c0_50 = arith.constant 0 : index
    %c126_51 = arith.constant 126 : index
    %39 = vector.load %arg1[%c1_49, %c0_50, %c126_51] : memref<2x4x352xf32, #tpu.memory_space<vmem>>, vector<1x4x64xf32>
    %40 = vector.shape_cast %39 : vector<1x4x64xf32> to vector<4x64xf32>
    %c24_52 = arith.constant 24 : index
    %c64_53 = arith.constant 64 : index
    %41 = vector.load %arg5[%c24_52, %c64_53] : memref<272x128xf32, #tpu.memory_space<vmem>>, vector<4x64xf32>
    tpu.vector_store %arg5[%c24_52, %c64_53], %40 {strides = array<i32>} : memref<272x128xf32, #tpu.memory_space<vmem>>, vector<4x64xf32>,
    %c0_54 = arith.constant 0 : index
    %c0_55 = arith.constant 0 : index
    %c127 = arith.constant 127 : index
    %42 = vector.load %arg1[%c0_54, %c0_55, %c127] : memref<2x4x352xf32, #tpu.memory_space<vmem>>, vector<1x4x64xf32>
    %43 = vector.shape_cast %42 : vector<1x4x64xf32> to vector<4x64xf32>
    %c28 = arith.constant 28 : index
    %c0_56 = arith.constant 0 : index
    %44 = vector.load %arg5[%c28, %c0_56] : memref<272x128xf32, #tpu.memory_space<vmem>>, vector<4x64xf32>
    tpu.vector_store %arg5[%c28, %c0_56], %43 {strides = array<i32>} : memref<272x128xf32, #tpu.memory_space<vmem>>, vector<4x64xf32>,
    %c1_57 = arith.constant 1 : index
    %c0_58 = arith.constant 0 : index
    %c127_59 = arith.constant 127 : index
    %45 = vector.load %arg1[%c1_57, %c0_58, %c127_59] : memref<2x4x352xf32, #tpu.memory_space<vmem>>, vector<1x4x64xf32>
    %46 = vector.shape_cast %45 : vector<1x4x64xf32> to vector<4x64xf32>
    %c28_60 = arith.constant 28 : index
    %c64_61 = arith.constant 64 : index
    %47 = vector.load %arg5[%c28_60, %c64_61] : memref<272x128xf32, #tpu.memory_space<vmem>>, vector<4x64xf32>
    tpu.vector_store %arg5[%c28_60, %c64_61], %46 {strides = array<i32>} : memref<272x128xf32, #tpu.memory_space<vmem>>, vector<4x64xf32>,
    %c0_62 = arith.constant 0 : index
    %c0_63 = arith.constant 0 : index
    %c128 = arith.constant 128 : index
    %48 = vector.load %arg1[%c0_62, %c0_63, %c128] : memref<2x4x352xf32, #tpu.memory_space<vmem>>, vector<1x4x64xf32>
    %49 = vector.shape_cast %48 : vector<1x4x64xf32> to vector<4x64xf32>
    %c32 = arith.constant 32 : index
    %c0_64 = arith.constant 0 : index
    %50 = vector.load %arg5[%c32, %c0_64] : memref<272x128xf32, #tpu.memory_space<vmem>>, vector<4x64xf32>
    tpu.vector_store %arg5[%c32, %c0_64], %49 {strides = array<i32>} : memref<272x128xf32, #tpu.memory_space<vmem>>, vector<4x64xf32>,
    %c1_65 = arith.constant 1 : index
    %c0_66 = arith.constant 0 : index
    %c128_67 = arith.constant 128 : index
    %51 = vector.load %arg1[%c1_65, %c0_66, %c128_67] : memref<2x4x352xf32, #tpu.memory_space<vmem>>, vector<1x4x64xf32>
    %52 = vector.shape_cast %51 : vector<1x4x64xf32> to vector<4x64xf32>
    %c32_68 = arith.constant 32 : index
    %c64_69 = arith.constant 64 : index
    %53 = vector.load %arg5[%c32_68, %c64_69] : memref<272x128xf32, #tpu.memory_space<vmem>>, vector<4x64xf32>
    tpu.vector_store %arg5[%c32_68, %c64_69], %52 {strides = array<i32>} : memref<272x128xf32, #tpu.memory_space<vmem>>, vector<4x64xf32>,
    %c0_70 = arith.constant 0 : index
    %c0_71 = arith.constant 0 : index
    %c129 = arith.constant 129 : index
    %54 = vector.load %arg1[%c0_70, %c0_71, %c129] : memref<2x4x352xf32, #tpu.memory_space<vmem>>, vector<1x4x64xf32>
    %55 = vector.shape_cast %54 : vector<1x4x64xf32> to vector<4x64xf32>
    %c36 = arith.constant 36 : index
    %c0_72 = arith.constant 0 : index
    %56 = vector.load %arg5[%c36, %c0_72] : memref<272x128xf32, #tpu.memory_space<vmem>>, vector<4x64xf32>
    tpu.vector_store %arg5[%c36, %c0_72], %55 {strides = array<i32>} : memref<272x128xf32, #tpu.memory_space<vmem>>, vector<4x64xf32>,
    %c1_73 = arith.constant 1 : index
    %c0_74 = arith.constant 0 : index
    %c129_75 = arith.constant 129 : index
    %57 = vector.load %arg1[%c1_73, %c0_74, %c129_75] : memref<2x4x352xf32, #tpu.memory_space<vmem>>, vector<1x4x64xf32>
    %58 = vector.shape_cast %57 : vector<1x4x64xf32> to vector<4x64xf32>
    %c36_76 = arith.constant 36 : index
    %c64_77 = arith.constant 64 : index
    %59 = vector.load %arg5[%c36_76, %c64_77] : memref<272x128xf32, #tpu.memory_space<vmem>>, vector<4x64xf32>
    tpu.vector_store %arg5[%c36_76, %c64_77], %58 {strides = array<i32>} : memref<272x128xf32, #tpu.memory_space<vmem>>, vector<4x64xf32>,
    %c0_78 = arith.constant 0 : index
    %c0_79 = arith.constant 0 : index
    %c130 = arith.constant 130 : index
    %60 = vector.load %arg1[%c0_78, %c0_79, %c130] : memref<2x4x352xf32, #tpu.memory_space<vmem>>, vector<1x4x64xf32>
    %61 = vector.shape_cast %60 : vector<1x4x64xf32> to vector<4x64xf32>
    %c40 = arith.constant 40 : index
    %c0_80 = arith.constant 0 : index
    %62 = vector.load %arg5[%c40, %c0_80] : memref<272x128xf32, #tpu.memory_space<vmem>>, vector<4x64xf32>
    tpu.vector_store %arg5[%c40, %c0_80], %61 {strides = array<i32>} : memref<272x128xf32, #tpu.memory_space<vmem>>, vector<4x64xf32>,
    %c1_81 = arith.constant 1 : index
    %c0_82 = arith.constant 0 : index
    %c130_83 = arith.constant 130 : index
    %63 = vector.load %arg1[%c1_81, %c0_82, %c130_83] : memref<2x4x352xf32, #tpu.memory_space<vmem>>, vector<1x4x64xf32>
    %64 = vector.shape_cast %63 : vector<1x4x64xf32> to vector<4x64xf32>
    %c40_84 = arith.constant 40 : index
    %c64_85 = arith.constant 64 : index
    %65 = vector.load %arg5[%c40_84, %c64_85] : memref<272x128xf32, #tpu.memory_space<vmem>>, vector<4x64xf32>
    tpu.vector_store %arg5[%c40_84, %c64_85], %64 {strides = array<i32>} : memref<272x128xf32, #tpu.memory_space<vmem>>, vector<4x64xf32>,
    %c0_86 = arith.constant 0 : index
    %c0_87 = arith.constant 0 : index
    %c131 = arith.constant 131 : index
    %66 = vector.load %arg1[%c0_86, %c0_87, %c131] : memref<2x4x352xf32, #tpu.memory_space<vmem>>, vector<1x4x64xf32>
    %67 = vector.shape_cast %66 : vector<1x4x64xf32> to vector<4x64xf32>
    %c44 = arith.constant 44 : index
    %c0_88 = arith.constant 0 : index
    %68 = vector.load %arg5[%c44, %c0_88] : memref<272x128xf32, #tpu.memory_space<vmem>>, vector<4x64xf32>
    tpu.vector_store %arg5[%c44, %c0_88], %67 {strides = array<i32>} : memref<272x128xf32, #tpu.memory_space<vmem>>, vector<4x64xf32>,
    %c1_89 = arith.constant 1 : index
    %c0_90 = arith.constant 0 : index
    %c131_91 = arith.constant 131 : index
    %69 = vector.load %arg1[%c1_89, %c0_90, %c131_91] : memref<2x4x352xf32, #tpu.memory_space<vmem>>, vector<1x4x64xf32>
    %70 = vector.shape_cast %69 : vector<1x4x64xf32> to vector<4x64xf32>
    %c44_92 = arith.constant 44 : index
    %c64_93 = arith.constant 64 : index
    %71 = vector.load %arg5[%c44_92, %c64_93] : memref<272x128xf32, #tpu.memory_space<vmem>>, vector<4x64xf32>
    tpu.vector_store %arg5[%c44_92, %c64_93], %70 {strides = array<i32>} : memref<272x128xf32, #tpu.memory_space<vmem>>, vector<4x64xf32>,
    %c0_94 = arith.constant 0 : index
    %c0_95 = arith.constant 0 : index
    %c132 = arith.constant 132 : index
    %72 = vector.load %arg1[%c0_94, %c0_95, %c132] : memref<2x4x352xf32, #tpu.memory_space<vmem>>, vector<1x4x64xf32>
    %73 = vector.shape_cast %72 : vector<1x4x64xf32> to vector<4x64xf32>
    %c48 = arith.constant 48 : index
    %c0_96 = arith.constant 0 : index
    %74 = vector.load %arg5[%c48, %c0_96] : memref<272x128xf32, #tpu.memory_space<vmem>>, vector<4x64xf32>
    tpu.vector_store %arg5[%c48, %c0_96], %73 {strides = array<i32>} : memref<272x128xf32, #tpu.memory_space<vmem>>, vector<4x64xf32>,
    %c1_97 = arith.constant 1 : index
    %c0_98 = arith.constant 0 : index
    %c132_99 = arith.constant 132 : index
    %75 = vector.load %arg1[%c1_97, %c0_98, %c132_99] : memref<2x4x352xf32, #tpu.memory_space<vmem>>, vector<1x4x64xf32>
    %76 = vector.shape_cast %75 : vector<1x4x64xf32> to vector<4x64xf32>
    %c48_100 = arith.constant 48 : index
    %c64_101 = arith.constant 64 : index
    %77 = vector.load %arg5[%c48_100, %c64_101] : memref<272x128xf32, #tpu.memory_space<vmem>>, vector<4x64xf32>
    tpu.vector_store %arg5[%c48_100, %c64_101], %76 {strides = array<i32>} : memref<272x128xf32, #tpu.memory_space<vmem>>, vector<4x64xf32>,
    %c0_102 = arith.constant 0 : index
    %c0_103 = arith.constant 0 : index
    %c133 = arith.constant 133 : index
    %78 = vector.load %arg1[%c0_102, %c0_103, %c133] : memref<2x4x352xf32, #tpu.memory_space<vmem>>, vector<1x4x64xf32>
    %79 = vector.shape_cast %78 : vector<1x4x64xf32> to vector<4x64xf32>
    %c52 = arith.constant 52 : index
    %c0_104 = arith.constant 0 : index
    %80 = vector.load %arg5[%c52, %c0_104] : memref<272x128xf32, #tpu.memory_space<vmem>>, vector<4x64xf32>
    tpu.vector_store %arg5[%c52, %c0_104], %79 {strides = array<i32>} : memref<272x128xf32, #tpu.memory_space<vmem>>, vector<4x64xf32>,
    %c1_105 = arith.constant 1 : index
    %c0_106 = arith.constant 0 : index
    %c133_107 = arith.constant 133 : index
    %81 = vector.load %arg1[%c1_105, %c0_106, %c133_107] : memref<2x4x352xf32, #tpu.memory_space<vmem>>, vector<1x4x64xf32>
    %82 = vector.shape_cast %81 : vector<1x4x64xf32> to vector<4x64xf32>
    %c52_108 = arith.constant 52 : index
    %c64_109 = arith.constant 64 : index
    %83 = vector.load %arg5[%c52_108, %c64_109] : memref<272x128xf32, #tpu.memory_space<vmem>>, vector<4x64xf32>
    tpu.vector_store %arg5[%c52_108, %c64_109], %82 {strides = array<i32>} : memref<272x128xf32, #tpu.memory_space<vmem>>, vector<4x64xf32>,
    %c0_110 = arith.constant 0 : index
    %c0_111 = arith.constant 0 : index
    %c134 = arith.constant 134 : index
    %84 = vector.load %arg1[%c0_110, %c0_111, %c134] : memref<2x4x352xf32, #tpu.memory_space<vmem>>, vector<1x4x64xf32>
    %85 = vector.shape_cast %84 : vector<1x4x64xf32> to vector<4x64xf32>
    %c56 = arith.constant 56 : index
    %c0_112 = arith.constant 0 : index
    %86 = vector.load %arg5[%c56, %c0_112] : memref<272x128xf32, #tpu.memory_space<vmem>>, vector<4x64xf32>
    tpu.vector_store %arg5[%c56, %c0_112], %85 {strides = array<i32>} : memref<272x128xf32, #tpu.memory_space<vmem>>, vector<4x64xf32>,
    %c1_113 = arith.constant 1 : index
    %c0_114 = arith.constant 0 : index
    %c134_115 = arith.constant 134 : index
    %87 = vector.load %arg1[%c1_113, %c0_114, %c134_115] : memref<2x4x352xf32, #tpu.memory_space<vmem>>, vector<1x4x64xf32>
    %88 = vector.shape_cast %87 : vector<1x4x64xf32> to vector<4x64xf32>
    %c56_116 = arith.constant 56 : index
    %c64_117 = arith.constant 64 : index
    %89 = vector.load %arg5[%c56_116, %c64_117] : memref<272x128xf32, #tpu.memory_space<vmem>>, vector<4x64xf32>
    tpu.vector_store %arg5[%c56_116, %c64_117], %88 {strides = array<i32>} : memref<272x128xf32, #tpu.memory_space<vmem>>, vector<4x64xf32>,
    %c0_118 = arith.constant 0 : index
    %c0_119 = arith.constant 0 : index
    %c135 = arith.constant 135 : index
    %90 = vector.load %arg1[%c0_118, %c0_119, %c135] : memref<2x4x352xf32, #tpu.memory_space<vmem>>, vector<1x4x64xf32>
    %91 = vector.shape_cast %90 : vector<1x4x64xf32> to vector<4x64xf32>
    %c60 = arith.constant 60 : index
    %c0_120 = arith.constant 0 : index
    %92 = vector.load %arg5[%c60, %c0_120] : memref<272x128xf32, #tpu.memory_space<vmem>>, vector<4x64xf32>
    tpu.vector_store %arg5[%c60, %c0_120], %91 {strides = array<i32>} : memref<272x128xf32, #tpu.memory_space<vmem>>, vector<4x64xf32>,
    %c1_121 = arith.constant 1 : index
    %c0_122 = arith.constant 0 : index
    %c135_123 = arith.constant 135 : index
    %93 = vector.load %arg1[%c1_121, %c0_122, %c135_123] : memref<2x4x352xf32, #tpu.memory_space<vmem>>, vector<1x4x64xf32>
    %94 = vector.shape_cast %93 : vector<1x4x64xf32> to vector<4x64xf32>
    %c60_124 = arith.constant 60 : index
    %c64_125 = arith.constant 64 : index
    %95 = vector.load %arg5[%c60_124, %c64_125] : memref<272x128xf32, #tpu.memory_space<vmem>>, vector<4x64xf32>
    tpu.vector_store %arg5[%c60_124, %c64_125], %94 {strides = array<i32>} : memref<272x128xf32, #tpu.memory_space<vmem>>, vector<4x64xf32>,
    %c0_126 = arith.constant 0 : index
    %c0_127 = arith.constant 0 : index
    %c136 = arith.constant 136 : index
    %96 = vector.load %arg1[%c0_126, %c0_127, %c136] : memref<2x4x352xf32, #tpu.memory_space<vmem>>, vector<1x4x64xf32>
    %97 = vector.shape_cast %96 : vector<1x4x64xf32> to vector<4x64xf32>
    %c64_128 = arith.constant 64 : index
    %c0_129 = arith.constant 0 : index
    %98 = vector.load %arg5[%c64_128, %c0_129] : memref<272x128xf32, #tpu.memory_space<vmem>>, vector<4x64xf32>
    tpu.vector_store %arg5[%c64_128, %c0_129], %97 {strides = array<i32>} : memref<272x128xf32, #tpu.memory_space<vmem>>, vector<4x64xf32>,
    %c1_130 = arith.constant 1 : index
    %c0_131 = arith.constant 0 : index
    %c136_132 = arith.constant 136 : index
    %99 = vector.load %arg1[%c1_130, %c0_131, %c136_132] : memref<2x4x352xf32, #tpu.memory_space<vmem>>, vector<1x4x64xf32>
    %100 = vector.shape_cast %99 : vector<1x4x64xf32> to vector<4x64xf32>
    %c64_133 = arith.constant 64 : index
    %c64_134 = arith.constant 64 : index
    %101 = vector.load %arg5[%c64_133, %c64_134] : memref<272x128xf32, #tpu.memory_space<vmem>>, vector<4x64xf32>
    tpu.vector_store %arg5[%c64_133, %c64_134], %100 {strides = array<i32>} : memref<272x128xf32, #tpu.memory_space<vmem>>, vector<4x64xf32>,
    %c0_135 = arith.constant 0 : index
    %c0_136 = arith.constant 0 : index
    %c137 = arith.constant 137 : index
    %102 = vector.load %arg1[%c0_135, %c0_136, %c137] : memref<2x4x352xf32, #tpu.memory_space<vmem>>, vector<1x4x64xf32>
    %103 = vector.shape_cast %102 : vector<1x4x64xf32> to vector<4x64xf32>
    %c68 = arith.constant 68 : index
    %c0_137 = arith.constant 0 : index
    %104 = vector.load %arg5[%c68, %c0_137] : memref<272x128xf32, #tpu.memory_space<vmem>>, vector<4x64xf32>
    tpu.vector_store %arg5[%c68, %c0_137], %103 {strides = array<i32>} : memref<272x128xf32, #tpu.memory_space<vmem>>, vector<4x64xf32>,
    %c1_138 = arith.constant 1 : index
    %c0_139 = arith.constant 0 : index
    %c137_140 = arith.constant 137 : index
    %105 = vector.load %arg1[%c1_138, %c0_139, %c137_140] : memref<2x4x352xf32, #tpu.memory_space<vmem>>, vector<1x4x64xf32>
    %106 = vector.shape_cast %105 : vector<1x4x64xf32> to vector<4x64xf32>
    %c68_141 = arith.constant 68 : index
    %c64_142 = arith.constant 64 : index
    %107 = vector.load %arg5[%c68_141, %c64_142] : memref<272x128xf32, #tpu.memory_space<vmem>>, vector<4x64xf32>
    tpu.vector_store %arg5[%c68_141, %c64_142], %106 {strides = array<i32>} : memref<272x128xf32, #tpu.memory_space<vmem>>, vector<4x64xf32>,
    %c0_143 = arith.constant 0 : index
    %c0_144 = arith.constant 0 : index
    %c138 = arith.constant 138 : index
    %108 = vector.load %arg1[%c0_143, %c0_144, %c138] : memref<2x4x352xf32, #tpu.memory_space<vmem>>, vector<1x4x64xf32>
    %109 = vector.shape_cast %108 : vector<1x4x64xf32> to vector<4x64xf32>
    %c72 = arith.constant 72 : index
    %c0_145 = arith.constant 0 : index
    %110 = vector.load %arg5[%c72, %c0_145] : memref<272x128xf32, #tpu.memory_space<vmem>>, vector<4x64xf32>
    tpu.vector_store %arg5[%c72, %c0_145], %109 {strides = array<i32>} : memref<272x128xf32, #tpu.memory_space<vmem>>, vector<4x64xf32>,
    %c1_146 = arith.constant 1 : index
    %c0_147 = arith.constant 0 : index
    %c138_148 = arith.constant 138 : index
    %111 = vector.load %arg1[%c1_146, %c0_147, %c138_148] : memref<2x4x352xf32, #tpu.memory_space<vmem>>, vector<1x4x64xf32>
    %112 = vector.shape_cast %111 : vector<1x4x64xf32> to vector<4x64xf32>
    %c72_149 = arith.constant 72 : index
    %c64_150 = arith.constant 64 : index
    %113 = vector.load %arg5[%c72_149, %c64_150] : memref<272x128xf32, #tpu.memory_space<vmem>>, vector<4x64xf32>
    tpu.vector_store %arg5[%c72_149, %c64_150], %112 {strides = array<i32>} : memref<272x128xf32, #tpu.memory_space<vmem>>, vector<4x64xf32>,
    %c0_151 = arith.constant 0 : index
    %c0_152 = arith.constant 0 : index
    %c139 = arith.constant 139 : index
    %114 = vector.load %arg1[%c0_151, %c0_152, %c139] : memref<2x4x352xf32, #tpu.memory_space<vmem>>, vector<1x4x64xf32>
    %115 = vector.shape_cast %114 : vector<1x4x64xf32> to vector<4x64xf32>
    %c76 = arith.constant 76 : index
    %c0_153 = arith.constant 0 : index
    %116 = vector.load %arg5[%c76, %c0_153] : memref<272x128xf32, #tpu.memory_space<vmem>>, vector<4x64xf32>
    tpu.vector_store %arg5[%c76, %c0_153], %115 {strides = array<i32>} : memref<272x128xf32, #tpu.memory_space<vmem>>, vector<4x64xf32>,
    %c1_154 = arith.constant 1 : index
    %c0_155 = arith.constant 0 : index
    %c139_156 = arith.constant 139 : index
    %117 = vector.load %arg1[%c1_154, %c0_155, %c139_156] : memref<2x4x352xf32, #tpu.memory_space<vmem>>, vector<1x4x64xf32>
    %118 = vector.shape_cast %117 : vector<1x4x64xf32> to vector<4x64xf32>
    %c76_157 = arith.constant 76 : index
    %c64_158 = arith.constant 64 : index
    %119 = vector.load %arg5[%c76_157, %c64_158] : memref<272x128xf32, #tpu.memory_space<vmem>>, vector<4x64xf32>
    tpu.vector_store %arg5[%c76_157, %c64_158], %118 {strides = array<i32>} : memref<272x128xf32, #tpu.memory_space<vmem>>, vector<4x64xf32>,
    %c0_159 = arith.constant 0 : index
    %c0_160 = arith.constant 0 : index
    %c140 = arith.constant 140 : index
    %120 = vector.load %arg1[%c0_159, %c0_160, %c140] : memref<2x4x352xf32, #tpu.memory_space<vmem>>, vector<1x4x64xf32>
    %121 = vector.shape_cast %120 : vector<1x4x64xf32> to vector<4x64xf32>
    %c80 = arith.constant 80 : index
    %c0_161 = arith.constant 0 : index
    %122 = vector.load %arg5[%c80, %c0_161] : memref<272x128xf32, #tpu.memory_space<vmem>>, vector<4x64xf32>
    tpu.vector_store %arg5[%c80, %c0_161], %121 {strides = array<i32>} : memref<272x128xf32, #tpu.memory_space<vmem>>, vector<4x64xf32>,
    %c1_162 = arith.constant 1 : index
    %c0_163 = arith.constant 0 : index
    %c140_164 = arith.constant 140 : index
    %123 = vector.load %arg1[%c1_162, %c0_163, %c140_164] : memref<2x4x352xf32, #tpu.memory_space<vmem>>, vector<1x4x64xf32>
    %124 = vector.shape_cast %123 : vector<1x4x64xf32> to vector<4x64xf32>
    %c80_165 = arith.constant 80 : index
    %c64_166 = arith.constant 64 : index
    %125 = vector.load %arg5[%c80_165, %c64_166] : memref<272x128xf32, #tpu.memory_space<vmem>>, vector<4x64xf32>
    tpu.vector_store %arg5[%c80_165, %c64_166], %124 {strides = array<i32>} : memref<272x128xf32, #tpu.memory_space<vmem>>, vector<4x64xf32>,
    %c0_167 = arith.constant 0 : index
    %c0_168 = arith.constant 0 : index
    %c141 = arith.constant 141 : index
    %126 = vector.load %arg1[%c0_167, %c0_168, %c141] : memref<2x4x352xf32, #tpu.memory_space<vmem>>, vector<1x4x64xf32>
    %127 = vector.shape_cast %126 : vector<1x4x64xf32> to vector<4x64xf32>
    %c84 = arith.constant 84 : index
    %c0_169 = arith.constant 0 : index
    %128 = vector.load %arg5[%c84, %c0_169] : memref<272x128xf32, #tpu.memory_space<vmem>>, vector<4x64xf32>
    tpu.vector_store %arg5[%c84, %c0_169], %127 {strides = array<i32>} : memref<272x128xf32, #tpu.memory_space<vmem>>, vector<4x64xf32>,
    %c1_170 = arith.constant 1 : index
    %c0_171 = arith.constant 0 : index
    %c141_172 = arith.constant 141 : index
    %129 = vector.load %arg1[%c1_170, %c0_171, %c141_172] : memref<2x4x352xf32, #tpu.memory_space<vmem>>, vector<1x4x64xf32>
    %130 = vector.shape_cast %129 : vector<1x4x64xf32> to vector<4x64xf32>
    %c84_173 = arith.constant 84 : index
    %c64_174 = arith.constant 64 : index
    %131 = vector.load %arg5[%c84_173, %c64_174] : memref<272x128xf32, #tpu.memory_space<vmem>>, vector<4x64xf32>
    tpu.vector_store %arg5[%c84_173, %c64_174], %130 {strides = array<i32>} : memref<272x128xf32, #tpu.memory_space<vmem>>, vector<4x64xf32>,
    %c0_175 = arith.constant 0 : index
    %c0_176 = arith.constant 0 : index
    %c142 = arith.constant 142 : index
    %132 = vector.load %arg1[%c0_175, %c0_176, %c142] : memref<2x4x352xf32, #tpu.memory_space<vmem>>, vector<1x4x64xf32>
    %133 = vector.shape_cast %132 : vector<1x4x64xf32> to vector<4x64xf32>
    %c88 = arith.constant 88 : index
    %c0_177 = arith.constant 0 : index
    %134 = vector.load %arg5[%c88, %c0_177] : memref<272x128xf32, #tpu.memory_space<vmem>>, vector<4x64xf32>
    tpu.vector_store %arg5[%c88, %c0_177], %133 {strides = array<i32>} : memref<272x128xf32, #tpu.memory_space<vmem>>, vector<4x64xf32>,
    %c1_178 = arith.constant 1 : index
    %c0_179 = arith.constant 0 : index
    %c142_180 = arith.constant 142 : index
    %135 = vector.load %arg1[%c1_178, %c0_179, %c142_180] : memref<2x4x352xf32, #tpu.memory_space<vmem>>, vector<1x4x64xf32>
    %136 = vector.shape_cast %135 : vector<1x4x64xf32> to vector<4x64xf32>
    %c88_181 = arith.constant 88 : index
    %c64_182 = arith.constant 64 : index
    %137 = vector.load %arg5[%c88_181, %c64_182] : memref<272x128xf32, #tpu.memory_space<vmem>>, vector<4x64xf32>
    tpu.vector_store %arg5[%c88_181, %c64_182], %136 {strides = array<i32>} : memref<272x128xf32, #tpu.memory_space<vmem>>, vector<4x64xf32>,
    %c0_183 = arith.constant 0 : index
    %c0_184 = arith.constant 0 : index
    %c143 = arith.constant 143 : index
    %138 = vector.load %arg1[%c0_183, %c0_184, %c143] : memref<2x4x352xf32, #tpu.memory_space<vmem>>, vector<1x4x64xf32>
    %139 = vector.shape_cast %138 : vector<1x4x64xf32> to vector<4x64xf32>
    %c92 = arith.constant 92 : index
    %c0_185 = arith.constant 0 : index
    %140 = vector.load %arg5[%c92, %c0_185] : memref<272x128xf32, #tpu.memory_space<vmem>>, vector<4x64xf32>
    tpu.vector_store %arg5[%c92, %c0_185], %139 {strides = array<i32>} : memref<272x128xf32, #tpu.memory_space<vmem>>, vector<4x64xf32>,
    %c1_186 = arith.constant 1 : index
    %c0_187 = arith.constant 0 : index
    %c143_188 = arith.constant 143 : index
    %141 = vector.load %arg1[%c1_186, %c0_187, %c143_188] : memref<2x4x352xf32, #tpu.memory_space<vmem>>, vector<1x4x64xf32>
    %142 = vector.shape_cast %141 : vector<1x4x64xf32> to vector<4x64xf32>
    %c92_189 = arith.constant 92 : index
    %c64_190 = arith.constant 64 : index
    %143 = vector.load %arg5[%c92_189, %c64_190] : memref<272x128xf32, #tpu.memory_space<vmem>>, vector<4x64xf32>
    tpu.vector_store %arg5[%c92_189, %c64_190], %142 {strides = array<i32>} : memref<272x128xf32, #tpu.memory_space<vmem>>, vector<4x64xf32>,
    %c0_191 = arith.constant 0 : index
    %c0_192 = arith.constant 0 : index
    %c144 = arith.constant 144 : index
    %144 = vector.load %arg1[%c0_191, %c0_192, %c144] : memref<2x4x352xf32, #tpu.memory_space<vmem>>, vector<1x4x64xf32>
    %145 = vector.shape_cast %144 : vector<1x4x64xf32> to vector<4x64xf32>
    %c96 = arith.constant 96 : index
    %c0_193 = arith.constant 0 : index
    %146 = vector.load %arg5[%c96, %c0_193] : memref<272x128xf32, #tpu.memory_space<vmem>>, vector<4x64xf32>
    tpu.vector_store %arg5[%c96, %c0_193], %145 {strides = array<i32>} : memref<272x128xf32, #tpu.memory_space<vmem>>, vector<4x64xf32>,
    %c1_194 = arith.constant 1 : index
    %c0_195 = arith.constant 0 : index
    %c144_196 = arith.constant 144 : index
    %147 = vector.load %arg1[%c1_194, %c0_195, %c144_196] : memref<2x4x352xf32, #tpu.memory_space<vmem>>, vector<1x4x64xf32>
    %148 = vector.shape_cast %147 : vector<1x4x64xf32> to vector<4x64xf32>
    %c96_197 = arith.constant 96 : index
    %c64_198 = arith.constant 64 : index
    %149 = vector.load %arg5[%c96_197, %c64_198] : memref<272x128xf32, #tpu.memory_space<vmem>>, vector<4x64xf32>
    tpu.vector_store %arg5[%c96_197, %c64_198], %148 {strides = array<i32>} : memref<272x128xf32, #tpu.memory_space<vmem>>, vector<4x64xf32>,
    %c0_199 = arith.constant 0 : index
    %c0_200 = arith.constant 0 : index
    %c145 = arith.constant 145 : index
    %150 = vector.load %arg1[%c0_199, %c0_200, %c145] : memref<2x4x352xf32, #tpu.memory_space<vmem>>, vector<1x4x64xf32>
    %151 = vector.shape_cast %150 : vector<1x4x64xf32> to vector<4x64xf32>
    %c100 = arith.constant 100 : index
    %c0_201 = arith.constant 0 : index
    %152 = vector.load %arg5[%c100, %c0_201] : memref<272x128xf32, #tpu.memory_space<vmem>>, vector<4x64xf32>
    tpu.vector_store %arg5[%c100, %c0_201], %151 {strides = array<i32>} : memref<272x128xf32, #tpu.memory_space<vmem>>, vector<4x64xf32>,
    %c1_202 = arith.constant 1 : index
    %c0_203 = arith.constant 0 : index
    %c145_204 = arith.constant 145 : index
    %153 = vector.load %arg1[%c1_202, %c0_203, %c145_204] : memref<2x4x352xf32, #tpu.memory_space<vmem>>, vector<1x4x64xf32>
    %154 = vector.shape_cast %153 : vector<1x4x64xf32> to vector<4x64xf32>
    %c100_205 = arith.constant 100 : index
    %c64_206 = arith.constant 64 : index
    %155 = vector.load %arg5[%c100_205, %c64_206] : memref<272x128xf32, #tpu.memory_space<vmem>>, vector<4x64xf32>
    tpu.vector_store %arg5[%c100_205, %c64_206], %154 {strides = array<i32>} : memref<272x128xf32, #tpu.memory_space<vmem>>, vector<4x64xf32>,
    %c0_207 = arith.constant 0 : index
    %c0_208 = arith.constant 0 : index
    %c146 = arith.constant 146 : index
    %156 = vector.load %arg1[%c0_207, %c0_208, %c146] : memref<2x4x352xf32, #tpu.memory_space<vmem>>, vector<1x4x64xf32>
    %157 = vector.shape_cast %156 : vector<1x4x64xf32> to vector<4x64xf32>
    %c104 = arith.constant 104 : index
    %c0_209 = arith.constant 0 : index
    %158 = vector.load %arg5[%c104, %c0_209] : memref<272x128xf32, #tpu.memory_space<vmem>>, vector<4x64xf32>
    tpu.vector_store %arg5[%c104, %c0_209], %157 {strides = array<i32>} : memref<272x128xf32, #tpu.memory_space<vmem>>, vector<4x64xf32>,
    %c1_210 = arith.constant 1 : index
    %c0_211 = arith.constant 0 : index
    %c146_212 = arith.constant 146 : index
    %159 = vector.load %arg1[%c1_210, %c0_211, %c146_212] : memref<2x4x352xf32, #tpu.memory_space<vmem>>, vector<1x4x64xf32>
    %160 = vector.shape_cast %159 : vector<1x4x64xf32> to vector<4x64xf32>
    %c104_213 = arith.constant 104 : index
    %c64_214 = arith.constant 64 : index
    %161 = vector.load %arg5[%c104_213, %c64_214] : memref<272x128xf32, #tpu.memory_space<vmem>>, vector<4x64xf32>
    tpu.vector_store %arg5[%c104_213, %c64_214], %160 {strides = array<i32>} : memref<272x128xf32, #tpu.memory_space<vmem>>, vector<4x64xf32>,
    %c0_215 = arith.constant 0 : index
    %c0_216 = arith.constant 0 : index
    %c147 = arith.constant 147 : index
    %162 = vector.load %arg1[%c0_215, %c0_216, %c147] : memref<2x4x352xf32, #tpu.memory_space<vmem>>, vector<1x4x64xf32>
    %163 = vector.shape_cast %162 : vector<1x4x64xf32> to vector<4x64xf32>
    %c108 = arith.constant 108 : index
    %c0_217 = arith.constant 0 : index
    %164 = vector.load %arg5[%c108, %c0_217] : memref<272x128xf32, #tpu.memory_space<vmem>>, vector<4x64xf32>
    tpu.vector_store %arg5[%c108, %c0_217], %163 {strides = array<i32>} : memref<272x128xf32, #tpu.memory_space<vmem>>, vector<4x64xf32>,
    %c1_218 = arith.constant 1 : index
    %c0_219 = arith.constant 0 : index
    %c147_220 = arith.constant 147 : index
    %165 = vector.load %arg1[%c1_218, %c0_219, %c147_220] : memref<2x4x352xf32, #tpu.memory_space<vmem>>, vector<1x4x64xf32>
    %166 = vector.shape_cast %165 : vector<1x4x64xf32> to vector<4x64xf32>
    %c108_221 = arith.constant 108 : index
    %c64_222 = arith.constant 64 : index
    %167 = vector.load %arg5[%c108_221, %c64_222] : memref<272x128xf32, #tpu.memory_space<vmem>>, vector<4x64xf32>
    tpu.vector_store %arg5[%c108_221, %c64_222], %166 {strides = array<i32>} : memref<272x128xf32, #tpu.memory_space<vmem>>, vector<4x64xf32>,
    %c0_223 = arith.constant 0 : index
    %c0_224 = arith.constant 0 : index
    %c148 = arith.constant 148 : index
    %168 = vector.load %arg1[%c0_223, %c0_224, %c148] : memref<2x4x352xf32, #tpu.memory_space<vmem>>, vector<1x4x64xf32>
    %169 = vector.shape_cast %168 : vector<1x4x64xf32> to vector<4x64xf32>
    %c112 = arith.constant 112 : index
    %c0_225 = arith.constant 0 : index
    %170 = vector.load %arg5[%c112, %c0_225] : memref<272x128xf32, #tpu.memory_space<vmem>>, vector<4x64xf32>
    tpu.vector_store %arg5[%c112, %c0_225], %169 {strides = array<i32>} : memref<272x128xf32, #tpu.memory_space<vmem>>, vector<4x64xf32>,
    %c1_226 = arith.constant 1 : index
    %c0_227 = arith.constant 0 : index
    %c148_228 = arith.constant 148 : index
    %171 = vector.load %arg1[%c1_226, %c0_227, %c148_228] : memref<2x4x352xf32, #tpu.memory_space<vmem>>, vector<1x4x64xf32>
    %172 = vector.shape_cast %171 : vector<1x4x64xf32> to vector<4x64xf32>
    %c112_229 = arith.constant 112 : index
    %c64_230 = arith.constant 64 : index
    %173 = vector.load %arg5[%c112_229, %c64_230] : memref<272x128xf32, #tpu.memory_space<vmem>>, vector<4x64xf32>
    tpu.vector_store %arg5[%c112_229, %c64_230], %172 {strides = array<i32>} : memref<272x128xf32, #tpu.memory_space<vmem>>, vector<4x64xf32>,
    %c0_231 = arith.constant 0 : index
    %c0_232 = arith.constant 0 : index
    %c149 = arith.constant 149 : index
    %174 = vector.load %arg1[%c0_231, %c0_232, %c149] : memref<2x4x352xf32, #tpu.memory_space<vmem>>, vector<1x4x64xf32>
    %175 = vector.shape_cast %174 : vector<1x4x64xf32> to vector<4x64xf32>
    %c116 = arith.constant 116 : index
    %c0_233 = arith.constant 0 : index
    %176 = vector.load %arg5[%c116, %c0_233] : memref<272x128xf32, #tpu.memory_space<vmem>>, vector<4x64xf32>
    tpu.vector_store %arg5[%c116, %c0_233], %175 {strides = array<i32>} : memref<272x128xf32, #tpu.memory_space<vmem>>, vector<4x64xf32>,
    %c1_234 = arith.constant 1 : index
    %c0_235 = arith.constant 0 : index
    %c149_236 = arith.constant 149 : index
    %177 = vector.load %arg1[%c1_234, %c0_235, %c149_236] : memref<2x4x352xf32, #tpu.memory_space<vmem>>, vector<1x4x64xf32>
    %178 = vector.shape_cast %177 : vector<1x4x64xf32> to vector<4x64xf32>
    %c116_237 = arith.constant 116 : index
    %c64_238 = arith.constant 64 : index
    %179 = vector.load %arg5[%c116_237, %c64_238] : memref<272x128xf32, #tpu.memory_space<vmem>>, vector<4x64xf32>
    tpu.vector_store %arg5[%c116_237, %c64_238], %178 {strides = array<i32>} : memref<272x128xf32, #tpu.memory_space<vmem>>, vector<4x64xf32>,
    %c0_239 = arith.constant 0 : index
    %c0_240 = arith.constant 0 : index
    %c150 = arith.constant 150 : index
    %180 = vector.load %arg1[%c0_239, %c0_240, %c150] : memref<2x4x352xf32, #tpu.memory_space<vmem>>, vector<1x4x64xf32>
    %181 = vector.shape_cast %180 : vector<1x4x64xf32> to vector<4x64xf32>
    %c120_241 = arith.constant 120 : index
    %c0_242 = arith.constant 0 : index
    %182 = vector.load %arg5[%c120_241, %c0_242] : memref<272x128xf32, #tpu.memory_space<vmem>>, vector<4x64xf32>
    tpu.vector_store %arg5[%c120_241, %c0_242], %181 {strides = array<i32>} : memref<272x128xf32, #tpu.memory_space<vmem>>, vector<4x64xf32>,
    %c1_243 = arith.constant 1 : index
    %c0_244 = arith.constant 0 : index
    %c150_245 = arith.constant 150 : index
    %183 = vector.load %arg1[%c1_243, %c0_244, %c150_245] : memref<2x4x352xf32, #tpu.memory_space<vmem>>, vector<1x4x64xf32>
    %184 = vector.shape_cast %183 : vector<1x4x64xf32> to vector<4x64xf32>
    %c120_246 = arith.constant 120 : index
    %c64_247 = arith.constant 64 : index
    %185 = vector.load %arg5[%c120_246, %c64_247] : memref<272x128xf32, #tpu.memory_space<vmem>>, vector<4x64xf32>
    tpu.vector_store %arg5[%c120_246, %c64_247], %184 {strides = array<i32>} : memref<272x128xf32, #tpu.memory_space<vmem>>, vector<4x64xf32>,
    %c0_248 = arith.constant 0 : index
    %c0_249 = arith.constant 0 : index
    %c151 = arith.constant 151 : index
    %186 = vector.load %arg1[%c0_248, %c0_249, %c151] : memref<2x4x352xf32, #tpu.memory_space<vmem>>, vector<1x4x64xf32>
    %187 = vector.shape_cast %186 : vector<1x4x64xf32> to vector<4x64xf32>
    %c124_250 = arith.constant 124 : index
    %c0_251 = arith.constant 0 : index
    %188 = vector.load %arg5[%c124_250, %c0_251] : memref<272x128xf32, #tpu.memory_space<vmem>>, vector<4x64xf32>
    tpu.vector_store %arg5[%c124_250, %c0_251], %187 {strides = array<i32>} : memref<272x128xf32, #tpu.memory_space<vmem>>, vector<4x64xf32>,
    %c1_252 = arith.constant 1 : index
    %c0_253 = arith.constant 0 : index
    %c151_254 = arith.constant 151 : index
    %189 = vector.load %arg1[%c1_252, %c0_253, %c151_254] : memref<2x4x352xf32, #tpu.memory_space<vmem>>, vector<1x4x64xf32>
    %190 = vector.shape_cast %189 : vector<1x4x64xf32> to vector<4x64xf32>
    %c124_255 = arith.constant 124 : index
    %c64_256 = arith.constant 64 : index
    %191 = vector.load %arg5[%c124_255, %c64_256] : memref<272x128xf32, #tpu.memory_space<vmem>>, vector<4x64xf32>
    tpu.vector_store %arg5[%c124_255, %c64_256], %190 {strides = array<i32>} : memref<272x128xf32, #tpu.memory_space<vmem>>, vector<4x64xf32>,
    %c0_257 = arith.constant 0 : index
    %c0_258 = arith.constant 0 : index
    %c152 = arith.constant 152 : index
    %192 = vector.load %arg1[%c0_257, %c0_258, %c152] : memref<2x4x352xf32, #tpu.memory_space<vmem>>, vector<1x4x64xf32>
    %193 = vector.shape_cast %192 : vector<1x4x64xf32> to vector<4x64xf32>
    %c128_259 = arith.constant 128 : index
    %c0_260 = arith.constant 0 : index
    %194 = vector.load %arg5[%c128_259, %c0_260] : memref<272x128xf32, #tpu.memory_space<vmem>>, vector<4x64xf32>
    tpu.vector_store %arg5[%c128_259, %c0_260], %193 {strides = array<i32>} : memref<272x128xf32, #tpu.memory_space<vmem>>, vector<4x64xf32>,
    %c1_261 = arith.constant 1 : index
    %c0_262 = arith.constant 0 : index
    %c152_263 = arith.constant 152 : index
    %195 = vector.load %arg1[%c1_261, %c0_262, %c152_263] : memref<2x4x352xf32, #tpu.memory_space<vmem>>, vector<1x4x64xf32>
    %196 = vector.shape_cast %195 : vector<1x4x64xf32> to vector<4x64xf32>
    %c128_264 = arith.constant 128 : index
    %c64_265 = arith.constant 64 : index
    %197 = vector.load %arg5[%c128_264, %c64_265] : memref<272x128xf32, #tpu.memory_space<vmem>>, vector<4x64xf32>
    tpu.vector_store %arg5[%c128_264, %c64_265], %196 {strides = array<i32>} : memref<272x128xf32, #tpu.memory_space<vmem>>, vector<4x64xf32>,
    %c0_266 = arith.constant 0 : index
    %c0_267 = arith.constant 0 : index
    %c153 = arith.constant 153 : index
    %198 = vector.load %arg1[%c0_266, %c0_267, %c153] : memref<2x4x352xf32, #tpu.memory_space<vmem>>, vector<1x4x64xf32>
    %199 = vector.shape_cast %198 : vector<1x4x64xf32> to vector<4x64xf32>
    %c132_268 = arith.constant 132 : index
    %c0_269 = arith.constant 0 : index
    %200 = vector.load %arg5[%c132_268, %c0_269] : memref<272x128xf32, #tpu.memory_space<vmem>>, vector<4x64xf32>
    tpu.vector_store %arg5[%c132_268, %c0_269], %199 {strides = array<i32>} : memref<272x128xf32, #tpu.memory_space<vmem>>, vector<4x64xf32>,
    %c1_270 = arith.constant 1 : index
    %c0_271 = arith.constant 0 : index
    %c153_272 = arith.constant 153 : index
    %201 = vector.load %arg1[%c1_270, %c0_271, %c153_272] : memref<2x4x352xf32, #tpu.memory_space<vmem>>, vector<1x4x64xf32>
    %202 = vector.shape_cast %201 : vector<1x4x64xf32> to vector<4x64xf32>
    %c132_273 = arith.constant 132 : index
    %c64_274 = arith.constant 64 : index
    %203 = vector.load %arg5[%c132_273, %c64_274] : memref<272x128xf32, #tpu.memory_space<vmem>>, vector<4x64xf32>
    tpu.vector_store %arg5[%c132_273, %c64_274], %202 {strides = array<i32>} : memref<272x128xf32, #tpu.memory_space<vmem>>, vector<4x64xf32>,
    %c0_275 = arith.constant 0 : index
    %c0_276 = arith.constant 0 : index
    %c154 = arith.constant 154 : index
    %204 = vector.load %arg1[%c0_275, %c0_276, %c154] : memref<2x4x352xf32, #tpu.memory_space<vmem>>, vector<1x4x64xf32>
    %205 = vector.shape_cast %204 : vector<1x4x64xf32> to vector<4x64xf32>
    %c136_277 = arith.constant 136 : index
    %c0_278 = arith.constant 0 : index
    %206 = vector.load %arg5[%c136_277, %c0_278] : memref<272x128xf32, #tpu.memory_space<vmem>>, vector<4x64xf32>
    tpu.vector_store %arg5[%c136_277, %c0_278], %205 {strides = array<i32>} : memref<272x128xf32, #tpu.memory_space<vmem>>, vector<4x64xf32>,
    %c1_279 = arith.constant 1 : index
    %c0_280 = arith.constant 0 : index
    %c154_281 = arith.constant 154 : index
    %207 = vector.load %arg1[%c1_279, %c0_280, %c154_281] : memref<2x4x352xf32, #tpu.memory_space<vmem>>, vector<1x4x64xf32>
    %208 = vector.shape_cast %207 : vector<1x4x64xf32> to vector<4x64xf32>
    %c136_282 = arith.constant 136 : index
    %c64_283 = arith.constant 64 : index
    %209 = vector.load %arg5[%c136_282, %c64_283] : memref<272x128xf32, #tpu.memory_space<vmem>>, vector<4x64xf32>
    tpu.vector_store %arg5[%c136_282, %c64_283], %208 {strides = array<i32>} : memref<272x128xf32, #tpu.memory_space<vmem>>, vector<4x64xf32>,
    %c0_284 = arith.constant 0 : index
    %c0_285 = arith.constant 0 : index
    %c155 = arith.constant 155 : index
    %210 = vector.load %arg1[%c0_284, %c0_285, %c155] : memref<2x4x352xf32, #tpu.memory_space<vmem>>, vector<1x4x64xf32>
    %211 = vector.shape_cast %210 : vector<1x4x64xf32> to vector<4x64xf32>
    %c140_286 = arith.constant 140 : index
    %c0_287 = arith.constant 0 : index
    %212 = vector.load %arg5[%c140_286, %c0_287] : memref<272x128xf32, #tpu.memory_space<vmem>>, vector<4x64xf32>
    tpu.vector_store %arg5[%c140_286, %c0_287], %211 {strides = array<i32>} : memref<272x128xf32, #tpu.memory_space<vmem>>, vector<4x64xf32>,
    %c1_288 = arith.constant 1 : index
    %c0_289 = arith.constant 0 : index
    %c155_290 = arith.constant 155 : index
    %213 = vector.load %arg1[%c1_288, %c0_289, %c155_290] : memref<2x4x352xf32, #tpu.memory_space<vmem>>, vector<1x4x64xf32>
    %214 = vector.shape_cast %213 : vector<1x4x64xf32> to vector<4x64xf32>
    %c140_291 = arith.constant 140 : index
    %c64_292 = arith.constant 64 : index
    %215 = vector.load %arg5[%c140_291, %c64_292] : memref<272x128xf32, #tpu.memory_space<vmem>>, vector<4x64xf32>
    tpu.vector_store %arg5[%c140_291, %c64_292], %214 {strides = array<i32>} : memref<272x128xf32, #tpu.memory_space<vmem>>, vector<4x64xf32>,
    %c0_293 = arith.constant 0 : index
    %c0_294 = arith.constant 0 : index
    %c156 = arith.constant 156 : index
    %216 = vector.load %arg1[%c0_293, %c0_294, %c156] : memref<2x4x352xf32, #tpu.memory_space<vmem>>, vector<1x4x64xf32>
    %217 = vector.shape_cast %216 : vector<1x4x64xf32> to vector<4x64xf32>
    %c144_295 = arith.constant 144 : index
    %c0_296 = arith.constant 0 : index
    %218 = vector.load %arg5[%c144_295, %c0_296] : memref<272x128xf32, #tpu.memory_space<vmem>>, vector<4x64xf32>
    tpu.vector_store %arg5[%c144_295, %c0_296], %217 {strides = array<i32>} : memref<272x128xf32, #tpu.memory_space<vmem>>, vector<4x64xf32>,
    %c1_297 = arith.constant 1 : index
    %c0_298 = arith.constant 0 : index
    %c156_299 = arith.constant 156 : index
    %219 = vector.load %arg1[%c1_297, %c0_298, %c156_299] : memref<2x4x352xf32, #tpu.memory_space<vmem>>, vector<1x4x64xf32>
    %220 = vector.shape_cast %219 : vector<1x4x64xf32> to vector<4x64xf32>
    %c144_300 = arith.constant 144 : index
    %c64_301 = arith.constant 64 : index
    %221 = vector.load %arg5[%c144_300, %c64_301] : memref<272x128xf32, #tpu.memory_space<vmem>>, vector<4x64xf32>
    tpu.vector_store %arg5[%c144_300, %c64_301], %220 {strides = array<i32>} : memref<272x128xf32, #tpu.memory_space<vmem>>, vector<4x64xf32>,
    %c0_302 = arith.constant 0 : index
    %c0_303 = arith.constant 0 : index
    %c157 = arith.constant 157 : index
    %222 = vector.load %arg1[%c0_302, %c0_303, %c157] : memref<2x4x352xf32, #tpu.memory_space<vmem>>, vector<1x4x64xf32>
    %223 = vector.shape_cast %222 : vector<1x4x64xf32> to vector<4x64xf32>
    %c148_304 = arith.constant 148 : index
    %c0_305 = arith.constant 0 : index
    %224 = vector.load %arg5[%c148_304, %c0_305] : memref<272x128xf32, #tpu.memory_space<vmem>>, vector<4x64xf32>
    tpu.vector_store %arg5[%c148_304, %c0_305], %223 {strides = array<i32>} : memref<272x128xf32, #tpu.memory_space<vmem>>, vector<4x64xf32>,
    %c1_306 = arith.constant 1 : index
    %c0_307 = arith.constant 0 : index
    %c157_308 = arith.constant 157 : index
    %225 = vector.load %arg1[%c1_306, %c0_307, %c157_308] : memref<2x4x352xf32, #tpu.memory_space<vmem>>, vector<1x4x64xf32>
    %226 = vector.shape_cast %225 : vector<1x4x64xf32> to vector<4x64xf32>
    %c148_309 = arith.constant 148 : index
    %c64_310 = arith.constant 64 : index
    %227 = vector.load %arg5[%c148_309, %c64_310] : memref<272x128xf32, #tpu.memory_space<vmem>>, vector<4x64xf32>
    tpu.vector_store %arg5[%c148_309, %c64_310], %226 {strides = array<i32>} : memref<272x128xf32, #tpu.memory_space<vmem>>, vector<4x64xf32>,
    %c0_311 = arith.constant 0 : index
    %c0_312 = arith.constant 0 : index
    %c158 = arith.constant 158 : index
    %228 = vector.load %arg1[%c0_311, %c0_312, %c158] : memref<2x4x352xf32, #tpu.memory_space<vmem>>, vector<1x4x64xf32>
    %229 = vector.shape_cast %228 : vector<1x4x64xf32> to vector<4x64xf32>
    %c152_313 = arith.constant 152 : index
    %c0_314 = arith.constant 0 : index
    %230 = vector.load %arg5[%c152_313, %c0_314] : memref<272x128xf32, #tpu.memory_space<vmem>>, vector<4x64xf32>
    tpu.vector_store %arg5[%c152_313, %c0_314], %229 {strides = array<i32>} : memref<272x128xf32, #tpu.memory_space<vmem>>, vector<4x64xf32>,
    %c1_315 = arith.constant 1 : index
    %c0_316 = arith.constant 0 : index
    %c158_317 = arith.constant 158 : index
    %231 = vector.load %arg1[%c1_315, %c0_316, %c158_317] : memref<2x4x352xf32, #tpu.memory_space<vmem>>, vector<1x4x64xf32>
    %232 = vector.shape_cast %231 : vector<1x4x64xf32> to vector<4x64xf32>
    %c152_318 = arith.constant 152 : index
    %c64_319 = arith.constant 64 : index
    %233 = vector.load %arg5[%c152_318, %c64_319] : memref<272x128xf32, #tpu.memory_space<vmem>>, vector<4x64xf32>
    tpu.vector_store %arg5[%c152_318, %c64_319], %232 {strides = array<i32>} : memref<272x128xf32, #tpu.memory_space<vmem>>, vector<4x64xf32>,
    %c0_320 = arith.constant 0 : index
    %c0_321 = arith.constant 0 : index
    %c159 = arith.constant 159 : index
    %234 = vector.load %arg1[%c0_320, %c0_321, %c159] : memref<2x4x352xf32, #tpu.memory_space<vmem>>, vector<1x4x64xf32>
    %235 = vector.shape_cast %234 : vector<1x4x64xf32> to vector<4x64xf32>
    %c156_322 = arith.constant 156 : index
    %c0_323 = arith.constant 0 : index
    %236 = vector.load %arg5[%c156_322, %c0_323] : memref<272x128xf32, #tpu.memory_space<vmem>>, vector<4x64xf32>
    tpu.vector_store %arg5[%c156_322, %c0_323], %235 {strides = array<i32>} : memref<272x128xf32, #tpu.memory_space<vmem>>, vector<4x64xf32>,
    %c1_324 = arith.constant 1 : index
    %c0_325 = arith.constant 0 : index
    %c159_326 = arith.constant 159 : index
    %237 = vector.load %arg1[%c1_324, %c0_325, %c159_326] : memref<2x4x352xf32, #tpu.memory_space<vmem>>, vector<1x4x64xf32>
    %238 = vector.shape_cast %237 : vector<1x4x64xf32> to vector<4x64xf32>
    %c156_327 = arith.constant 156 : index
    %c64_328 = arith.constant 64 : index
    %239 = vector.load %arg5[%c156_327, %c64_328] : memref<272x128xf32, #tpu.memory_space<vmem>>, vector<4x64xf32>
    tpu.vector_store %arg5[%c156_327, %c64_328], %238 {strides = array<i32>} : memref<272x128xf32, #tpu.memory_space<vmem>>, vector<4x64xf32>,
    %c0_329 = arith.constant 0 : index
    %c0_330 = arith.constant 0 : index
    %c160 = arith.constant 160 : index
    %240 = vector.load %arg1[%c0_329, %c0_330, %c160] : memref<2x4x352xf32, #tpu.memory_space<vmem>>, vector<1x4x64xf32>
    %241 = vector.shape_cast %240 : vector<1x4x64xf32> to vector<4x64xf32>
    %c160_331 = arith.constant 160 : index
    %c0_332 = arith.constant 0 : index
    %242 = vector.load %arg5[%c160_331, %c0_332] : memref<272x128xf32, #tpu.memory_space<vmem>>, vector<4x64xf32>
    tpu.vector_store %arg5[%c160_331, %c0_332], %241 {strides = array<i32>} : memref<272x128xf32, #tpu.memory_space<vmem>>, vector<4x64xf32>,
    %c1_333 = arith.constant 1 : index
    %c0_334 = arith.constant 0 : index
    %c160_335 = arith.constant 160 : index
    %243 = vector.load %arg1[%c1_333, %c0_334, %c160_335] : memref<2x4x352xf32, #tpu.memory_space<vmem>>, vector<1x4x64xf32>
    %244 = vector.shape_cast %243 : vector<1x4x64xf32> to vector<4x64xf32>
    %c160_336 = arith.constant 160 : index
    %c64_337 = arith.constant 64 : index
    %245 = vector.load %arg5[%c160_336, %c64_337] : memref<272x128xf32, #tpu.memory_space<vmem>>, vector<4x64xf32>
    tpu.vector_store %arg5[%c160_336, %c64_337], %244 {strides = array<i32>} : memref<272x128xf32, #tpu.memory_space<vmem>>, vector<4x64xf32>,
    %c0_338 = arith.constant 0 : index
    %c0_339 = arith.constant 0 : index
    %c161 = arith.constant 161 : index
    %246 = vector.load %arg1[%c0_338, %c0_339, %c161] : memref<2x4x352xf32, #tpu.memory_space<vmem>>, vector<1x4x64xf32>
    %247 = vector.shape_cast %246 : vector<1x4x64xf32> to vector<4x64xf32>
    %c164 = arith.constant 164 : index
    %c0_340 = arith.constant 0 : index
    %248 = vector.load %arg5[%c164, %c0_340] : memref<272x128xf32, #tpu.memory_space<vmem>>, vector<4x64xf32>
    tpu.vector_store %arg5[%c164, %c0_340], %247 {strides = array<i32>} : memref<272x128xf32, #tpu.memory_space<vmem>>, vector<4x64xf32>,
    %c1_341 = arith.constant 1 : index
    %c0_342 = arith.constant 0 : index
    %c161_343 = arith.constant 161 : index
    %249 = vector.load %arg1[%c1_341, %c0_342, %c161_343] : memref<2x4x352xf32, #tpu.memory_space<vmem>>, vector<1x4x64xf32>
    %250 = vector.shape_cast %249 : vector<1x4x64xf32> to vector<4x64xf32>
    %c164_344 = arith.constant 164 : index
    %c64_345 = arith.constant 64 : index
    %251 = vector.load %arg5[%c164_344, %c64_345] : memref<272x128xf32, #tpu.memory_space<vmem>>, vector<4x64xf32>
    tpu.vector_store %arg5[%c164_344, %c64_345], %250 {strides = array<i32>} : memref<272x128xf32, #tpu.memory_space<vmem>>, vector<4x64xf32>,
    %c0_346 = arith.constant 0 : index
    %c0_347 = arith.constant 0 : index
    %c162 = arith.constant 162 : index
    %252 = vector.load %arg1[%c0_346, %c0_347, %c162] : memref<2x4x352xf32, #tpu.memory_space<vmem>>, vector<1x4x64xf32>
    %253 = vector.shape_cast %252 : vector<1x4x64xf32> to vector<4x64xf32>
    %c168 = arith.constant 168 : index
    %c0_348 = arith.constant 0 : index
    %254 = vector.load %arg5[%c168, %c0_348] : memref<272x128xf32, #tpu.memory_space<vmem>>, vector<4x64xf32>
    tpu.vector_store %arg5[%c168, %c0_348], %253 {strides = array<i32>} : memref<272x128xf32, #tpu.memory_space<vmem>>, vector<4x64xf32>,
    %c1_349 = arith.constant 1 : index
    %c0_350 = arith.constant 0 : index
    %c162_351 = arith.constant 162 : index
    %255 = vector.load %arg1[%c1_349, %c0_350, %c162_351] : memref<2x4x352xf32, #tpu.memory_space<vmem>>, vector<1x4x64xf32>
    %256 = vector.shape_cast %255 : vector<1x4x64xf32> to vector<4x64xf32>
    %c168_352 = arith.constant 168 : index
    %c64_353 = arith.constant 64 : index
    %257 = vector.load %arg5[%c168_352, %c64_353] : memref<272x128xf32, #tpu.memory_space<vmem>>, vector<4x64xf32>
    tpu.vector_store %arg5[%c168_352, %c64_353], %256 {strides = array<i32>} : memref<272x128xf32, #tpu.memory_space<vmem>>, vector<4x64xf32>,
    %c0_354 = arith.constant 0 : index
    %c0_355 = arith.constant 0 : index
    %c163 = arith.constant 163 : index
    %258 = vector.load %arg1[%c0_354, %c0_355, %c163] : memref<2x4x352xf32, #tpu.memory_space<vmem>>, vector<1x4x64xf32>
    %259 = vector.shape_cast %258 : vector<1x4x64xf32> to vector<4x64xf32>
    %c172 = arith.constant 172 : index
    %c0_356 = arith.constant 0 : index
    %260 = vector.load %arg5[%c172, %c0_356] : memref<272x128xf32, #tpu.memory_space<vmem>>, vector<4x64xf32>
    tpu.vector_store %arg5[%c172, %c0_356], %259 {strides = array<i32>} : memref<272x128xf32, #tpu.memory_space<vmem>>, vector<4x64xf32>,
    %c1_357 = arith.constant 1 : index
    %c0_358 = arith.constant 0 : index
    %c163_359 = arith.constant 163 : index
    %261 = vector.load %arg1[%c1_357, %c0_358, %c163_359] : memref<2x4x352xf32, #tpu.memory_space<vmem>>, vector<1x4x64xf32>
    %262 = vector.shape_cast %261 : vector<1x4x64xf32> to vector<4x64xf32>
    %c172_360 = arith.constant 172 : index
    %c64_361 = arith.constant 64 : index
    %263 = vector.load %arg5[%c172_360, %c64_361] : memref<272x128xf32, #tpu.memory_space<vmem>>, vector<4x64xf32>
    tpu.vector_store %arg5[%c172_360, %c64_361], %262 {strides = array<i32>} : memref<272x128xf32, #tpu.memory_space<vmem>>, vector<4x64xf32>,
    %c0_362 = arith.constant 0 : index
    %c0_363 = arith.constant 0 : index
    %c164_364 = arith.constant 164 : index
    %264 = vector.load %arg1[%c0_362, %c0_363, %c164_364] : memref<2x4x352xf32, #tpu.memory_space<vmem>>, vector<1x4x64xf32>
    %265 = vector.shape_cast %264 : vector<1x4x64xf32> to vector<4x64xf32>
    %c176 = arith.constant 176 : index
    %c0_365 = arith.constant 0 : index
    %266 = vector.load %arg5[%c176, %c0_365] : memref<272x128xf32, #tpu.memory_space<vmem>>, vector<4x64xf32>
    tpu.vector_store %arg5[%c176, %c0_365], %265 {strides = array<i32>} : memref<272x128xf32, #tpu.memory_space<vmem>>, vector<4x64xf32>,
    %c1_366 = arith.constant 1 : index
    %c0_367 = arith.constant 0 : index
    %c164_368 = arith.constant 164 : index
    %267 = vector.load %arg1[%c1_366, %c0_367, %c164_368] : memref<2x4x352xf32, #tpu.memory_space<vmem>>, vector<1x4x64xf32>
    %268 = vector.shape_cast %267 : vector<1x4x64xf32> to vector<4x64xf32>
    %c176_369 = arith.constant 176 : index
    %c64_370 = arith.constant 64 : index
    %269 = vector.load %arg5[%c176_369, %c64_370] : memref<272x128xf32, #tpu.memory_space<vmem>>, vector<4x64xf32>
    tpu.vector_store %arg5[%c176_369, %c64_370], %268 {strides = array<i32>} : memref<272x128xf32, #tpu.memory_space<vmem>>, vector<4x64xf32>,
    %c0_371 = arith.constant 0 : index
    %c0_372 = arith.constant 0 : index
    %c165 = arith.constant 165 : index
    %270 = vector.load %arg1[%c0_371, %c0_372, %c165] : memref<2x4x352xf32, #tpu.memory_space<vmem>>, vector<1x4x64xf32>
    %271 = vector.shape_cast %270 : vector<1x4x64xf32> to vector<4x64xf32>
    %c180 = arith.constant 180 : index
    %c0_373 = arith.constant 0 : index
    %272 = vector.load %arg5[%c180, %c0_373] : memref<272x128xf32, #tpu.memory_space<vmem>>, vector<4x64xf32>
    tpu.vector_store %arg5[%c180, %c0_373], %271 {strides = array<i32>} : memref<272x128xf32, #tpu.memory_space<vmem>>, vector<4x64xf32>,
    %c1_374 = arith.constant 1 : index
    %c0_375 = arith.constant 0 : index
    %c165_376 = arith.constant 165 : index
    %273 = vector.load %arg1[%c1_374, %c0_375, %c165_376] : memref<2x4x352xf32, #tpu.memory_space<vmem>>, vector<1x4x64xf32>
    %274 = vector.shape_cast %273 : vector<1x4x64xf32> to vector<4x64xf32>
    %c180_377 = arith.constant 180 : index
    %c64_378 = arith.constant 64 : index
    %275 = vector.load %arg5[%c180_377, %c64_378] : memref<272x128xf32, #tpu.memory_space<vmem>>, vector<4x64xf32>
    tpu.vector_store %arg5[%c180_377, %c64_378], %274 {strides = array<i32>} : memref<272x128xf32, #tpu.memory_space<vmem>>, vector<4x64xf32>,
    %c0_379 = arith.constant 0 : index
    %c0_380 = arith.constant 0 : index
    %c166 = arith.constant 166 : index
    %276 = vector.load %arg1[%c0_379, %c0_380, %c166] : memref<2x4x352xf32, #tpu.memory_space<vmem>>, vector<1x4x64xf32>
    %277 = vector.shape_cast %276 : vector<1x4x64xf32> to vector<4x64xf32>
    %c184 = arith.constant 184 : index
    %c0_381 = arith.constant 0 : index
    %278 = vector.load %arg5[%c184, %c0_381] : memref<272x128xf32, #tpu.memory_space<vmem>>, vector<4x64xf32>
    tpu.vector_store %arg5[%c184, %c0_381], %277 {strides = array<i32>} : memref<272x128xf32, #tpu.memory_space<vmem>>, vector<4x64xf32>,
    %c1_382 = arith.constant 1 : index
    %c0_383 = arith.constant 0 : index
    %c166_384 = arith.constant 166 : index
    %279 = vector.load %arg1[%c1_382, %c0_383, %c166_384] : memref<2x4x352xf32, #tpu.memory_space<vmem>>, vector<1x4x64xf32>
    %280 = vector.shape_cast %279 : vector<1x4x64xf32> to vector<4x64xf32>
    %c184_385 = arith.constant 184 : index
    %c64_386 = arith.constant 64 : index
    %281 = vector.load %arg5[%c184_385, %c64_386] : memref<272x128xf32, #tpu.memory_space<vmem>>, vector<4x64xf32>
    tpu.vector_store %arg5[%c184_385, %c64_386], %280 {strides = array<i32>} : memref<272x128xf32, #tpu.memory_space<vmem>>, vector<4x64xf32>,
    %c0_387 = arith.constant 0 : index
    %c0_388 = arith.constant 0 : index
    %c167 = arith.constant 167 : index
    %282 = vector.load %arg1[%c0_387, %c0_388, %c167] : memref<2x4x352xf32, #tpu.memory_space<vmem>>, vector<1x4x64xf32>
    %283 = vector.shape_cast %282 : vector<1x4x64xf32> to vector<4x64xf32>
    %c188 = arith.constant 188 : index
    %c0_389 = arith.constant 0 : index
    %284 = vector.load %arg5[%c188, %c0_389] : memref<272x128xf32, #tpu.memory_space<vmem>>, vector<4x64xf32>
    tpu.vector_store %arg5[%c188, %c0_389], %283 {strides = array<i32>} : memref<272x128xf32, #tpu.memory_space<vmem>>, vector<4x64xf32>,
    %c1_390 = arith.constant 1 : index
    %c0_391 = arith.constant 0 : index
    %c167_392 = arith.constant 167 : index
    %285 = vector.load %arg1[%c1_390, %c0_391, %c167_392] : memref<2x4x352xf32, #tpu.memory_space<vmem>>, vector<1x4x64xf32>
    %286 = vector.shape_cast %285 : vector<1x4x64xf32> to vector<4x64xf32>
    %c188_393 = arith.constant 188 : index
    %c64_394 = arith.constant 64 : index
    %287 = vector.load %arg5[%c188_393, %c64_394] : memref<272x128xf32, #tpu.memory_space<vmem>>, vector<4x64xf32>
    tpu.vector_store %arg5[%c188_393, %c64_394], %286 {strides = array<i32>} : memref<272x128xf32, #tpu.memory_space<vmem>>, vector<4x64xf32>,
    %c0_395 = arith.constant 0 : index
    %c0_396 = arith.constant 0 : index
    %c168_397 = arith.constant 168 : index
    %288 = vector.load %arg1[%c0_395, %c0_396, %c168_397] : memref<2x4x352xf32, #tpu.memory_space<vmem>>, vector<1x4x64xf32>
    %289 = vector.shape_cast %288 : vector<1x4x64xf32> to vector<4x64xf32>
    %c192 = arith.constant 192 : index
    %c0_398 = arith.constant 0 : index
    %290 = vector.load %arg5[%c192, %c0_398] : memref<272x128xf32, #tpu.memory_space<vmem>>, vector<4x64xf32>
    tpu.vector_store %arg5[%c192, %c0_398], %289 {strides = array<i32>} : memref<272x128xf32, #tpu.memory_space<vmem>>, vector<4x64xf32>,
    %c1_399 = arith.constant 1 : index
    %c0_400 = arith.constant 0 : index
    %c168_401 = arith.constant 168 : index
    %291 = vector.load %arg1[%c1_399, %c0_400, %c168_401] : memref<2x4x352xf32, #tpu.memory_space<vmem>>, vector<1x4x64xf32>
    %292 = vector.shape_cast %291 : vector<1x4x64xf32> to vector<4x64xf32>
    %c192_402 = arith.constant 192 : index
    %c64_403 = arith.constant 64 : index
    %293 = vector.load %arg5[%c192_402, %c64_403] : memref<272x128xf32, #tpu.memory_space<vmem>>, vector<4x64xf32>
    tpu.vector_store %arg5[%c192_402, %c64_403], %292 {strides = array<i32>} : memref<272x128xf32, #tpu.memory_space<vmem>>, vector<4x64xf32>,
    %c0_404 = arith.constant 0 : index
    %c0_405 = arith.constant 0 : index
    %c0_406 = arith.constant 0 : index
    %294 = vector.load %arg1[%c0_404, %c0_405, %c0_406] : memref<2x4x352xf32, #tpu.memory_space<vmem>>, vector<1x4x64xf32>
    %295 = vector.shape_cast %294 : vector<1x4x64xf32> to vector<4x64xf32>
    %c196 = arith.constant 196 : index
    %c0_407 = arith.constant 0 : index
    %296 = vector.load %arg5[%c196, %c0_407] : memref<272x128xf32, #tpu.memory_space<vmem>>, vector<4x64xf32>
    tpu.vector_store %arg5[%c196, %c0_407], %295 {strides = array<i32>} : memref<272x128xf32, #tpu.memory_space<vmem>>, vector<4x64xf32>,
    %c1_408 = arith.constant 1 : index
    %c0_409 = arith.constant 0 : index
    %c0_410 = arith.constant 0 : index
    %297 = vector.load %arg1[%c1_408, %c0_409, %c0_410] : memref<2x4x352xf32, #tpu.memory_space<vmem>>, vector<1x4x64xf32>
    %298 = vector.shape_cast %297 : vector<1x4x64xf32> to vector<4x64xf32>
    %c196_411 = arith.constant 196 : index
    %c64_412 = arith.constant 64 : index
    %299 = vector.load %arg5[%c196_411, %c64_412] : memref<272x128xf32, #tpu.memory_space<vmem>>, vector<4x64xf32>
    tpu.vector_store %arg5[%c196_411, %c64_412], %298 {strides = array<i32>} : memref<272x128xf32, #tpu.memory_space<vmem>>, vector<4x64xf32>,
    %c0_413 = arith.constant 0 : index
    %c0_414 = arith.constant 0 : index
    %c48_415 = arith.constant 48 : index
    %300 = vector.load %arg1[%c0_413, %c0_414, %c48_415] : memref<2x4x352xf32, #tpu.memory_space<vmem>>, vector<1x4x64xf32>
    %301 = vector.shape_cast %300 : vector<1x4x64xf32> to vector<4x64xf32>
    %c200 = arith.constant 200 : index
    %c0_416 = arith.constant 0 : index
    %302 = vector.load %arg5[%c200, %c0_416] : memref<272x128xf32, #tpu.memory_space<vmem>>, vector<4x64xf32>
    tpu.vector_store %arg5[%c200, %c0_416], %301 {strides = array<i32>} : memref<272x128xf32, #tpu.memory_space<vmem>>, vector<4x64xf32>,
    %c1_417 = arith.constant 1 : index
    %c0_418 = arith.constant 0 : index
    %c48_419 = arith.constant 48 : index
    %303 = vector.load %arg1[%c1_417, %c0_418, %c48_419] : memref<2x4x352xf32, #tpu.memory_space<vmem>>, vector<1x4x64xf32>
    %304 = vector.shape_cast %303 : vector<1x4x64xf32> to vector<4x64xf32>
    %c200_420 = arith.constant 200 : index
    %c64_421 = arith.constant 64 : index
    %305 = vector.load %arg5[%c200_420, %c64_421] : memref<272x128xf32, #tpu.memory_space<vmem>>, vector<4x64xf32>
    tpu.vector_store %arg5[%c200_420, %c64_421], %304 {strides = array<i32>} : memref<272x128xf32, #tpu.memory_space<vmem>>, vector<4x64xf32>,
    %c0_422 = arith.constant 0 : index
    %c0_423 = arith.constant 0 : index
    %c96_424 = arith.constant 96 : index
    %306 = vector.load %arg1[%c0_422, %c0_423, %c96_424] : memref<2x4x352xf32, #tpu.memory_space<vmem>>, vector<1x4x64xf32>
    %307 = vector.shape_cast %306 : vector<1x4x64xf32> to vector<4x64xf32>
    %c204 = arith.constant 204 : index
    %c0_425 = arith.constant 0 : index
    %308 = vector.load %arg5[%c204, %c0_425] : memref<272x128xf32, #tpu.memory_space<vmem>>, vector<4x64xf32>
    tpu.vector_store %arg5[%c204, %c0_425], %307 {strides = array<i32>} : memref<272x128xf32, #tpu.memory_space<vmem>>, vector<4x64xf32>,
    %c1_426 = arith.constant 1 : index
    %c0_427 = arith.constant 0 : index
    %c96_428 = arith.constant 96 : index
    %309 = vector.load %arg1[%c1_426, %c0_427, %c96_428] : memref<2x4x352xf32, #tpu.memory_space<vmem>>, vector<1x4x64xf32>
    %310 = vector.shape_cast %309 : vector<1x4x64xf32> to vector<4x64xf32>
    %c204_429 = arith.constant 204 : index
    %c64_430 = arith.constant 64 : index
    %311 = vector.load %arg5[%c204_429, %c64_430] : memref<272x128xf32, #tpu.memory_space<vmem>>, vector<4x64xf32>
    tpu.vector_store %arg5[%c204_429, %c64_430], %310 {strides = array<i32>} : memref<272x128xf32, #tpu.memory_space<vmem>>, vector<4x64xf32>,
    %c0_431 = arith.constant 0 : index
    %c0_432 = arith.constant 0 : index
    %c144_433 = arith.constant 144 : index
    %312 = vector.load %arg1[%c0_431, %c0_432, %c144_433] : memref<2x4x352xf32, #tpu.memory_space<vmem>>, vector<1x4x64xf32>
    %313 = vector.shape_cast %312 : vector<1x4x64xf32> to vector<4x64xf32>
    %c208 = arith.constant 208 : index
    %c0_434 = arith.constant 0 : index
    %314 = vector.load %arg5[%c208, %c0_434] : memref<272x128xf32, #tpu.memory_space<vmem>>, vector<4x64xf32>
    tpu.vector_store %arg5[%c208, %c0_434], %313 {strides = array<i32>} : memref<272x128xf32, #tpu.memory_space<vmem>>, vector<4x64xf32>,
    %c1_435 = arith.constant 1 : index
    %c0_436 = arith.constant 0 : index
    %c144_437 = arith.constant 144 : index
    %315 = vector.load %arg1[%c1_435, %c0_436, %c144_437] : memref<2x4x352xf32, #tpu.memory_space<vmem>>, vector<1x4x64xf32>
    %316 = vector.shape_cast %315 : vector<1x4x64xf32> to vector<4x64xf32>
    %c208_438 = arith.constant 208 : index
    %c64_439 = arith.constant 64 : index
    %317 = vector.load %arg5[%c208_438, %c64_439] : memref<272x128xf32, #tpu.memory_space<vmem>>, vector<4x64xf32>
    tpu.vector_store %arg5[%c208_438, %c64_439], %316 {strides = array<i32>} : memref<272x128xf32, #tpu.memory_space<vmem>>, vector<4x64xf32>,
    %c0_440 = arith.constant 0 : index
    %c0_441 = arith.constant 0 : index
    %c192_442 = arith.constant 192 : index
    %318 = vector.load %arg1[%c0_440, %c0_441, %c192_442] : memref<2x4x352xf32, #tpu.memory_space<vmem>>, vector<1x4x64xf32>
    %319 = vector.shape_cast %318 : vector<1x4x64xf32> to vector<4x64xf32>
    %c212 = arith.constant 212 : index
    %c0_443 = arith.constant 0 : index
    %320 = vector.load %arg5[%c212, %c0_443] : memref<272x128xf32, #tpu.memory_space<vmem>>, vector<4x64xf32>
    tpu.vector_store %arg5[%c212, %c0_443], %319 {strides = array<i32>} : memref<272x128xf32, #tpu.memory_space<vmem>>, vector<4x64xf32>,
    %c1_444 = arith.constant 1 : index
    %c0_445 = arith.constant 0 : index
    %c192_446 = arith.constant 192 : index
    %321 = vector.load %arg1[%c1_444, %c0_445, %c192_446] : memref<2x4x352xf32, #tpu.memory_space<vmem>>, vector<1x4x64xf32>
    %322 = vector.shape_cast %321 : vector<1x4x64xf32> to vector<4x64xf32>
    %c212_447 = arith.constant 212 : index
    %c64_448 = arith.constant 64 : index
    %323 = vector.load %arg5[%c212_447, %c64_448] : memref<272x128xf32, #tpu.memory_space<vmem>>, vector<4x64xf32>
    tpu.vector_store %arg5[%c212_447, %c64_448], %322 {strides = array<i32>} : memref<272x128xf32, #tpu.memory_space<vmem>>, vector<4x64xf32>,
    %c0_449 = arith.constant 0 : index
    %c0_450 = arith.constant 0 : index
    %c240 = arith.constant 240 : index
    %324 = vector.load %arg1[%c0_449, %c0_450, %c240] : memref<2x4x352xf32, #tpu.memory_space<vmem>>, vector<1x4x64xf32>
    %325 = vector.shape_cast %324 : vector<1x4x64xf32> to vector<4x64xf32>
    %c216 = arith.constant 216 : index
    %c0_451 = arith.constant 0 : index
    %326 = vector.load %arg5[%c216, %c0_451] : memref<272x128xf32, #tpu.memory_space<vmem>>, vector<4x64xf32>
    tpu.vector_store %arg5[%c216, %c0_451], %325 {strides = array<i32>} : memref<272x128xf32, #tpu.memory_space<vmem>>, vector<4x64xf32>,
    %c1_452 = arith.constant 1 : index
    %c0_453 = arith.constant 0 : index
    %c240_454 = arith.constant 240 : index
    %327 = vector.load %arg1[%c1_452, %c0_453, %c240_454] : memref<2x4x352xf32, #tpu.memory_space<vmem>>, vector<1x4x64xf32>
    %328 = vector.shape_cast %327 : vector<1x4x64xf32> to vector<4x64xf32>
    %c216_455 = arith.constant 216 : index
    %c64_456 = arith.constant 64 : index
    %329 = vector.load %arg5[%c216_455, %c64_456] : memref<272x128xf32, #tpu.memory_space<vmem>>, vector<4x64xf32>
    tpu.vector_store %arg5[%c216_455, %c64_456], %328 {strides = array<i32>} : memref<272x128xf32, #tpu.memory_space<vmem>>, vector<4x64xf32>,
    %c0_457 = arith.constant 0 : index
    %c0_458 = arith.constant 0 : index
    %c288 = arith.constant 288 : index
    %330 = vector.load %arg1[%c0_457, %c0_458, %c288] : memref<2x4x352xf32, #tpu.memory_space<vmem>>, vector<1x4x64xf32>
    %331 = vector.shape_cast %330 : vector<1x4x64xf32> to vector<4x64xf32>
    %c220 = arith.constant 220 : index
    %c0_459 = arith.constant 0 : index
    %332 = vector.load %arg5[%c220, %c0_459] : memref<272x128xf32, #tpu.memory_space<vmem>>, vector<4x64xf32>
    tpu.vector_store %arg5[%c220, %c0_459], %331 {strides = array<i32>} : memref<272x128xf32, #tpu.memory_space<vmem>>, vector<4x64xf32>,
    %c1_460 = arith.constant 1 : index
    %c0_461 = arith.constant 0 : index
    %c288_462 = arith.constant 288 : index
    %333 = vector.load %arg1[%c1_460, %c0_461, %c288_462] : memref<2x4x352xf32, #tpu.memory_space<vmem>>, vector<1x4x64xf32>
    %334 = vector.shape_cast %333 : vector<1x4x64xf32> to vector<4x64xf32>
    %c220_463 = arith.constant 220 : index
    %c64_464 = arith.constant 64 : index
    %335 = vector.load %arg5[%c220_463, %c64_464] : memref<272x128xf32, #tpu.memory_space<vmem>>, vector<4x64xf32>
    tpu.vector_store %arg5[%c220_463, %c64_464], %334 {strides = array<i32>} : memref<272x128xf32, #tpu.memory_space<vmem>>, vector<4x64xf32>,
    %c0_465 = arith.constant 0 : index
    %c0_466 = arith.constant 0 : index
    %c104_467 = arith.constant 104 : index
    %336 = vector.load %arg1[%c0_465, %c0_466, %c104_467] : memref<2x4x352xf32, #tpu.memory_space<vmem>>, vector<1x4x64xf32>
    %337 = vector.shape_cast %336 : vector<1x4x64xf32> to vector<4x64xf32>
    %c224 = arith.constant 224 : index
    %c0_468 = arith.constant 0 : index
    %338 = vector.load %arg5[%c224, %c0_468] : memref<272x128xf32, #tpu.memory_space<vmem>>, vector<4x64xf32>
    tpu.vector_store %arg5[%c224, %c0_468], %337 {strides = array<i32>} : memref<272x128xf32, #tpu.memory_space<vmem>>, vector<4x64xf32>,
    %c1_469 = arith.constant 1 : index
    %c0_470 = arith.constant 0 : index
    %c104_471 = arith.constant 104 : index
    %339 = vector.load %arg1[%c1_469, %c0_470, %c104_471] : memref<2x4x352xf32, #tpu.memory_space<vmem>>, vector<1x4x64xf32>
    %340 = vector.shape_cast %339 : vector<1x4x64xf32> to vector<4x64xf32>
    %c224_472 = arith.constant 224 : index
    %c64_473 = arith.constant 64 : index
    %341 = vector.load %arg5[%c224_472, %c64_473] : memref<272x128xf32, #tpu.memory_space<vmem>>, vector<4x64xf32>
    tpu.vector_store %arg5[%c224_472, %c64_473], %340 {strides = array<i32>} : memref<272x128xf32, #tpu.memory_space<vmem>>, vector<4x64xf32>,
    %c0_474 = arith.constant 0 : index
    %c0_475 = arith.constant 0 : index
    %c120_476 = arith.constant 120 : index
    %342 = vector.load %arg1[%c0_474, %c0_475, %c120_476] : memref<2x4x352xf32, #tpu.memory_space<vmem>>, vector<1x4x64xf32>
    %343 = vector.shape_cast %342 : vector<1x4x64xf32> to vector<4x64xf32>
    %c228 = arith.constant 228 : index
    %c0_477 = arith.constant 0 : index
    %344 = vector.load %arg5[%c228, %c0_477] : memref<272x128xf32, #tpu.memory_space<vmem>>, vector<4x64xf32>
    tpu.vector_store %arg5[%c228, %c0_477], %343 {strides = array<i32>} : memref<272x128xf32, #tpu.memory_space<vmem>>, vector<4x64xf32>,
    %c1_478 = arith.constant 1 : index
    %c0_479 = arith.constant 0 : index
    %c120_480 = arith.constant 120 : index
    %345 = vector.load %arg1[%c1_478, %c0_479, %c120_480] : memref<2x4x352xf32, #tpu.memory_space<vmem>>, vector<1x4x64xf32>
    %346 = vector.shape_cast %345 : vector<1x4x64xf32> to vector<4x64xf32>
    %c228_481 = arith.constant 228 : index
    %c64_482 = arith.constant 64 : index
    %347 = vector.load %arg5[%c228_481, %c64_482] : memref<272x128xf32, #tpu.memory_space<vmem>>, vector<4x64xf32>
    tpu.vector_store %arg5[%c228_481, %c64_482], %346 {strides = array<i32>} : memref<272x128xf32, #tpu.memory_space<vmem>>, vector<4x64xf32>,
    %c0_483 = arith.constant 0 : index
    %c0_484 = arith.constant 0 : index
    %c136_485 = arith.constant 136 : index
    %348 = vector.load %arg1[%c0_483, %c0_484, %c136_485] : memref<2x4x352xf32, #tpu.memory_space<vmem>>, vector<1x4x64xf32>
    %349 = vector.shape_cast %348 : vector<1x4x64xf32> to vector<4x64xf32>
    %c232 = arith.constant 232 : index
    %c0_486 = arith.constant 0 : index
    %350 = vector.load %arg5[%c232, %c0_486] : memref<272x128xf32, #tpu.memory_space<vmem>>, vector<4x64xf32>
    tpu.vector_store %arg5[%c232, %c0_486], %349 {strides = array<i32>} : memref<272x128xf32, #tpu.memory_space<vmem>>, vector<4x64xf32>,
    %c1_487 = arith.constant 1 : index
    %c0_488 = arith.constant 0 : index
    %c136_489 = arith.constant 136 : index
    %351 = vector.load %arg1[%c1_487, %c0_488, %c136_489] : memref<2x4x352xf32, #tpu.memory_space<vmem>>, vector<1x4x64xf32>
    %352 = vector.shape_cast %351 : vector<1x4x64xf32> to vector<4x64xf32>
    %c232_490 = arith.constant 232 : index
    %c64_491 = arith.constant 64 : index
    %353 = vector.load %arg5[%c232_490, %c64_491] : memref<272x128xf32, #tpu.memory_space<vmem>>, vector<4x64xf32>
    tpu.vector_store %arg5[%c232_490, %c64_491], %352 {strides = array<i32>} : memref<272x128xf32, #tpu.memory_space<vmem>>, vector<4x64xf32>,
    %c0_492 = arith.constant 0 : index
    %c0_493 = arith.constant 0 : index
    %c152_494 = arith.constant 152 : index
    %354 = vector.load %arg1[%c0_492, %c0_493, %c152_494] : memref<2x4x352xf32, #tpu.memory_space<vmem>>, vector<1x4x64xf32>
    %355 = vector.shape_cast %354 : vector<1x4x64xf32> to vector<4x64xf32>
    %c236 = arith.constant 236 : index
    %c0_495 = arith.constant 0 : index
    %356 = vector.load %arg5[%c236, %c0_495] : memref<272x128xf32, #tpu.memory_space<vmem>>, vector<4x64xf32>
    tpu.vector_store %arg5[%c236, %c0_495], %355 {strides = array<i32>} : memref<272x128xf32, #tpu.memory_space<vmem>>, vector<4x64xf32>,
    %c1_496 = arith.constant 1 : index
    %c0_497 = arith.constant 0 : index
    %c152_498 = arith.constant 152 : index
    %357 = vector.load %arg1[%c1_496, %c0_497, %c152_498] : memref<2x4x352xf32, #tpu.memory_space<vmem>>, vector<1x4x64xf32>
    %358 = vector.shape_cast %357 : vector<1x4x64xf32> to vector<4x64xf32>
    %c236_499 = arith.constant 236 : index
    %c64_500 = arith.constant 64 : index
    %359 = vector.load %arg5[%c236_499, %c64_500] : memref<272x128xf32, #tpu.memory_space<vmem>>, vector<4x64xf32>
    tpu.vector_store %arg5[%c236_499, %c64_500], %358 {strides = array<i32>} : memref<272x128xf32, #tpu.memory_space<vmem>>, vector<4x64xf32>,
    %c0_501 = arith.constant 0 : index
    %c0_502 = arith.constant 0 : index
    %c168_503 = arith.constant 168 : index
    %360 = vector.load %arg1[%c0_501, %c0_502, %c168_503] : memref<2x4x352xf32, #tpu.memory_space<vmem>>, vector<1x4x64xf32>
    %361 = vector.shape_cast %360 : vector<1x4x64xf32> to vector<4x64xf32>
    %c240_504 = arith.constant 240 : index
    %c0_505 = arith.constant 0 : index
    %362 = vector.load %arg5[%c240_504, %c0_505] : memref<272x128xf32, #tpu.memory_space<vmem>>, vector<4x64xf32>
    tpu.vector_store %arg5[%c240_504, %c0_505], %361 {strides = array<i32>} : memref<272x128xf32, #tpu.memory_space<vmem>>, vector<4x64xf32>,
    %c1_506 = arith.constant 1 : index
    %c0_507 = arith.constant 0 : index
    %c168_508 = arith.constant 168 : index
    %363 = vector.load %arg1[%c1_506, %c0_507, %c168_508] : memref<2x4x352xf32, #tpu.memory_space<vmem>>, vector<1x4x64xf32>
    %364 = vector.shape_cast %363 : vector<1x4x64xf32> to vector<4x64xf32>
    %c240_509 = arith.constant 240 : index
    %c64_510 = arith.constant 64 : index
    %365 = vector.load %arg5[%c240_509, %c64_510] : memref<272x128xf32, #tpu.memory_space<vmem>>, vector<4x64xf32>
    tpu.vector_store %arg5[%c240_509, %c64_510], %364 {strides = array<i32>} : memref<272x128xf32, #tpu.memory_space<vmem>>, vector<4x64xf32>,
    %c0_511 = arith.constant 0 : index
    %c0_512 = arith.constant 0 : index
    %c184_513 = arith.constant 184 : index
    %366 = vector.load %arg1[%c0_511, %c0_512, %c184_513] : memref<2x4x352xf32, #tpu.memory_space<vmem>>, vector<1x4x64xf32>
    %367 = vector.shape_cast %366 : vector<1x4x64xf32> to vector<4x64xf32>
    %c244 = arith.constant 244 : index
    %c0_514 = arith.constant 0 : index
    %368 = vector.load %arg5[%c244, %c0_514] : memref<272x128xf32, #tpu.memory_space<vmem>>, vector<4x64xf32>
    tpu.vector_store %arg5[%c244, %c0_514], %367 {strides = array<i32>} : memref<272x128xf32, #tpu.memory_space<vmem>>, vector<4x64xf32>,
    %c1_515 = arith.constant 1 : index
    %c0_516 = arith.constant 0 : index
    %c184_517 = arith.constant 184 : index
    %369 = vector.load %arg1[%c1_515, %c0_516, %c184_517] : memref<2x4x352xf32, #tpu.memory_space<vmem>>, vector<1x4x64xf32>
    %370 = vector.shape_cast %369 : vector<1x4x64xf32> to vector<4x64xf32>
    %c244_518 = arith.constant 244 : index
    %c64_519 = arith.constant 64 : index
    %371 = vector.load %arg5[%c244_518, %c64_519] : memref<272x128xf32, #tpu.memory_space<vmem>>, vector<4x64xf32>
    tpu.vector_store %arg5[%c244_518, %c64_519], %370 {strides = array<i32>} : memref<272x128xf32, #tpu.memory_space<vmem>>, vector<4x64xf32>,
    %c0_520 = arith.constant 0 : index
    %c0_521 = arith.constant 0 : index
    %c124_522 = arith.constant 124 : index
    %372 = vector.load %arg1[%c0_520, %c0_521, %c124_522] : memref<2x4x352xf32, #tpu.memory_space<vmem>>, vector<1x4x64xf32>
    %373 = vector.shape_cast %372 : vector<1x4x64xf32> to vector<4x64xf32>
    %c248 = arith.constant 248 : index
    %c0_523 = arith.constant 0 : index
    %374 = vector.load %arg5[%c248, %c0_523] : memref<272x128xf32, #tpu.memory_space<vmem>>, vector<4x64xf32>
    tpu.vector_store %arg5[%c248, %c0_523], %373 {strides = array<i32>} : memref<272x128xf32, #tpu.memory_space<vmem>>, vector<4x64xf32>,
    %c1_524 = arith.constant 1 : index
    %c0_525 = arith.constant 0 : index
    %c124_526 = arith.constant 124 : index
    %375 = vector.load %arg1[%c1_524, %c0_525, %c124_526] : memref<2x4x352xf32, #tpu.memory_space<vmem>>, vector<1x4x64xf32>
    %376 = vector.shape_cast %375 : vector<1x4x64xf32> to vector<4x64xf32>
    %c248_527 = arith.constant 248 : index
    %c64_528 = arith.constant 64 : index
    %377 = vector.load %arg5[%c248_527, %c64_528] : memref<272x128xf32, #tpu.memory_space<vmem>>, vector<4x64xf32>
    tpu.vector_store %arg5[%c248_527, %c64_528], %376 {strides = array<i32>} : memref<272x128xf32, #tpu.memory_space<vmem>>, vector<4x64xf32>,
    %c0_529 = arith.constant 0 : index
    %c0_530 = arith.constant 0 : index
    %c132_531 = arith.constant 132 : index
    %378 = vector.load %arg1[%c0_529, %c0_530, %c132_531] : memref<2x4x352xf32, #tpu.memory_space<vmem>>, vector<1x4x64xf32>
    %379 = vector.shape_cast %378 : vector<1x4x64xf32> to vector<4x64xf32>
    %c252 = arith.constant 252 : index
    %c0_532 = arith.constant 0 : index
    %380 = vector.load %arg5[%c252, %c0_532] : memref<272x128xf32, #tpu.memory_space<vmem>>, vector<4x64xf32>
    tpu.vector_store %arg5[%c252, %c0_532], %379 {strides = array<i32>} : memref<272x128xf32, #tpu.memory_space<vmem>>, vector<4x64xf32>,
    %c1_533 = arith.constant 1 : index
    %c0_534 = arith.constant 0 : index
    %c132_535 = arith.constant 132 : index
    %381 = vector.load %arg1[%c1_533, %c0_534, %c132_535] : memref<2x4x352xf32, #tpu.memory_space<vmem>>, vector<1x4x64xf32>
    %382 = vector.shape_cast %381 : vector<1x4x64xf32> to vector<4x64xf32>
    %c252_536 = arith.constant 252 : index
    %c64_537 = arith.constant 64 : index
    %383 = vector.load %arg5[%c252_536, %c64_537] : memref<272x128xf32, #tpu.memory_space<vmem>>, vector<4x64xf32>
    tpu.vector_store %arg5[%c252_536, %c64_537], %382 {strides = array<i32>} : memref<272x128xf32, #tpu.memory_space<vmem>>, vector<4x64xf32>,
    %c0_538 = arith.constant 0 : index
    %c0_539 = arith.constant 0 : index
    %c140_540 = arith.constant 140 : index
    %384 = vector.load %arg1[%c0_538, %c0_539, %c140_540] : memref<2x4x352xf32, #tpu.memory_space<vmem>>, vector<1x4x64xf32>
    %385 = vector.shape_cast %384 : vector<1x4x64xf32> to vector<4x64xf32>
    %c256 = arith.constant 256 : index
    %c0_541 = arith.constant 0 : index
    %386 = vector.load %arg5[%c256, %c0_541] : memref<272x128xf32, #tpu.memory_space<vmem>>, vector<4x64xf32>
    tpu.vector_store %arg5[%c256, %c0_541], %385 {strides = array<i32>} : memref<272x128xf32, #tpu.memory_space<vmem>>, vector<4x64xf32>,
    %c1_542 = arith.constant 1 : index
    %c0_543 = arith.constant 0 : index
    %c140_544 = arith.constant 140 : index
    %387 = vector.load %arg1[%c1_542, %c0_543, %c140_544] : memref<2x4x352xf32, #tpu.memory_space<vmem>>, vector<1x4x64xf32>
    %388 = vector.shape_cast %387 : vector<1x4x64xf32> to vector<4x64xf32>
    %c256_545 = arith.constant 256 : index
    %c64_546 = arith.constant 64 : index
    %389 = vector.load %arg5[%c256_545, %c64_546] : memref<272x128xf32, #tpu.memory_space<vmem>>, vector<4x64xf32>
    tpu.vector_store %arg5[%c256_545, %c64_546], %388 {strides = array<i32>} : memref<272x128xf32, #tpu.memory_space<vmem>>, vector<4x64xf32>,
    %c0_547 = arith.constant 0 : index
    %c0_548 = arith.constant 0 : index
    %c148_549 = arith.constant 148 : index
    %390 = vector.load %arg1[%c0_547, %c0_548, %c148_549] : memref<2x4x352xf32, #tpu.memory_space<vmem>>, vector<1x4x64xf32>
    %391 = vector.shape_cast %390 : vector<1x4x64xf32> to vector<4x64xf32>
    %c260 = arith.constant 260 : index
    %c0_550 = arith.constant 0 : index
    %392 = vector.load %arg5[%c260, %c0_550] : memref<272x128xf32, #tpu.memory_space<vmem>>, vector<4x64xf32>
    tpu.vector_store %arg5[%c260, %c0_550], %391 {strides = array<i32>} : memref<272x128xf32, #tpu.memory_space<vmem>>, vector<4x64xf32>,
    %c1_551 = arith.constant 1 : index
    %c0_552 = arith.constant 0 : index
    %c148_553 = arith.constant 148 : index
    %393 = vector.load %arg1[%c1_551, %c0_552, %c148_553] : memref<2x4x352xf32, #tpu.memory_space<vmem>>, vector<1x4x64xf32>
    %394 = vector.shape_cast %393 : vector<1x4x64xf32> to vector<4x64xf32>
    %c260_554 = arith.constant 260 : index
    %c64_555 = arith.constant 64 : index
    %395 = vector.load %arg5[%c260_554, %c64_555] : memref<272x128xf32, #tpu.memory_space<vmem>>, vector<4x64xf32>
    tpu.vector_store %arg5[%c260_554, %c64_555], %394 {strides = array<i32>} : memref<272x128xf32, #tpu.memory_space<vmem>>, vector<4x64xf32>,
    %c0_556 = arith.constant 0 : index
    %c0_557 = arith.constant 0 : index
    %c156_558 = arith.constant 156 : index
    %396 = vector.load %arg1[%c0_556, %c0_557, %c156_558] : memref<2x4x352xf32, #tpu.memory_space<vmem>>, vector<1x4x64xf32>
    %397 = vector.shape_cast %396 : vector<1x4x64xf32> to vector<4x64xf32>
    %c264 = arith.constant 264 : index
    %c0_559 = arith.constant 0 : index
    %398 = vector.load %arg5[%c264, %c0_559] : memref<272x128xf32, #tpu.memory_space<vmem>>, vector<4x64xf32>
    tpu.vector_store %arg5[%c264, %c0_559], %397 {strides = array<i32>} : memref<272x128xf32, #tpu.memory_space<vmem>>, vector<4x64xf32>,
    %c1_560 = arith.constant 1 : index
    %c0_561 = arith.constant 0 : index
    %c156_562 = arith.constant 156 : index
    %399 = vector.load %arg1[%c1_560, %c0_561, %c156_562] : memref<2x4x352xf32, #tpu.memory_space<vmem>>, vector<1x4x64xf32>
    %400 = vector.shape_cast %399 : vector<1x4x64xf32> to vector<4x64xf32>
    %c264_563 = arith.constant 264 : index
    %c64_564 = arith.constant 64 : index
    %401 = vector.load %arg5[%c264_563, %c64_564] : memref<272x128xf32, #tpu.memory_space<vmem>>, vector<4x64xf32>
    tpu.vector_store %arg5[%c264_563, %c64_564], %400 {strides = array<i32>} : memref<272x128xf32, #tpu.memory_space<vmem>>, vector<4x64xf32>,
    %c0_565 = arith.constant 0 : index
    %c0_566 = arith.constant 0 : index
    %c164_567 = arith.constant 164 : index
    %402 = vector.load %arg1[%c0_565, %c0_566, %c164_567] : memref<2x4x352xf32, #tpu.memory_space<vmem>>, vector<1x4x64xf32>
    %403 = vector.shape_cast %402 : vector<1x4x64xf32> to vector<4x64xf32>
    %c268 = arith.constant 268 : index
    %c0_568 = arith.constant 0 : index
    %404 = vector.load %arg5[%c268, %c0_568] : memref<272x128xf32, #tpu.memory_space<vmem>>, vector<4x64xf32>
    tpu.vector_store %arg5[%c268, %c0_568], %403 {strides = array<i32>} : memref<272x128xf32, #tpu.memory_space<vmem>>, vector<4x64xf32>,
    %c1_569 = arith.constant 1 : index
    %c0_570 = arith.constant 0 : index
    %c164_571 = arith.constant 164 : index
    %405 = vector.load %arg1[%c1_569, %c0_570, %c164_571] : memref<2x4x352xf32, #tpu.memory_space<vmem>>, vector<1x4x64xf32>
    %406 = vector.shape_cast %405 : vector<1x4x64xf32> to vector<4x64xf32>
    %c268_572 = arith.constant 268 : index
    %c64_573 = arith.constant 64 : index
    %407 = vector.load %arg5[%c268_572, %c64_573] : memref<272x128xf32, #tpu.memory_space<vmem>>, vector<4x64xf32>
    tpu.vector_store %arg5[%c268_572, %c64_573], %406 {strides = array<i32>} : memref<272x128xf32, #tpu.memory_space<vmem>>, vector<4x64xf32>,
    %c0_574 = arith.constant 0 : index
    %c0_575 = arith.constant 0 : index
    %408 = vector.load %arg2[%c0_574, %c0_575] : memref<8x272xf32, #tpu.memory_space<vmem>>, vector<8x272xf32>
    %c0_576 = arith.constant 0 : index
    %c0_577 = arith.constant 0 : index
    %409 = vector.load %arg5[%c0_576, %c0_577] : memref<272x128xf32, #tpu.memory_space<vmem>>, vector<272x128xf32>
    %cst = arith.constant dense<0.000000e+00> : vector<8x128xf32>
    %410 = tpu.matmul %408, %409, %cst {dimension_numbers = #tpu.dot_dimension_numbers<[1], [0], [0], [1], [0, 0, 1, 1], [], []>} : vector<8x272xf32>, vector<272x128xf32>, vector<8x128xf32> -> vector<8x128xf32>
    %c0_578 = arith.constant 0 : index
    %c0_579 = arith.constant 0 : index
    %411 = vector.load %arg3[%c0_578, %c0_579] : memref<8x1xf32, #tpu.memory_space<vmem>>, vector<8x1xf32>
    %412 = vector.broadcast %411 : vector<8x1xf32> to vector<8x128xf32>
    %413 = arith.addf %410, %412 : vector<8x128xf32>
    %c0_580 = arith.constant 0 : index
    %c0_581 = arith.constant 0 : index
    %c0_582 = arith.constant 0 : index
    %414 = vector.load %arg4[%c0_580, %c0_581, %c0_582] : memref<1x8x128xf32, #tpu.memory_space<vmem>>, vector<1x8x128xf32>
    %415 = vector.shape_cast %414 : vector<1x8x128xf32> to vector<8x128xf32>
    %416 = vector.shape_cast %413 : vector<8x128xf32> to vector<1x8x128xf32>
    tpu.vector_store %arg4[%c0_580, %c0_581, %c0_582], %416 {strides = array<i32>} : memref<1x8x128xf32, #tpu.memory_space<vmem>>, vector<1x8x128xf32>,
    return
  }
  func.func @transform_0(%arg0: i32) -> (i32, i32, i32) {
    %c0_i32 = arith.constant 0 : i32
    %c0_i32_0 = arith.constant 0 : i32
    %c0_i32_1 = arith.constant 0 : i32
    return %arg0, %c0_i32, %c0_i32_0 : i32, i32, i32
  }
  func.func @transform_1(%arg0: i32) -> (i32, i32) {
    %c0_i32 = arith.constant 0 : i32
    %c0_i32_0 = arith.constant 0 : i32
    %c0_i32_1 = arith.constant 0 : i32
    return %c0_i32, %c0_i32_0 : i32, i32
  }
  func.func @transform_2(%arg0: i32) -> (i32, i32) {
    %c0_i32 = arith.constant 0 : i32
    %c0_i32_0 = arith.constant 0 : i32
    %c0_i32_1 = arith.constant 0 : i32
    return %c0_i32, %c0_i32_0 : i32, i32
  }
  func.func @transform_3(%arg0: i32) -> (i32, i32, i32) {
    %c0_i32 = arith.constant 0 : i32
    %c0_i32_0 = arith.constant 0 : i32
    %c0_i32_1 = arith.constant 0 : i32
    return %arg0, %c0_i32, %c0_i32_0 : i32, i32, i32
  }
}

</mosaic_0001>

<llo_original>
// kernel: tpu_custom_call.1
$region0: #{tpu_custom_call.1}
  #allocation0 [shape = 'u32[]', space=smem, size = 0x4, offset = 0x4, fixed_abs, tag = 'smem constant byte address 0x4 - core index']
  #allocation1 [shape = 'u32[144,128]{1,0:T(1,128)}', space=vmem, size = 0x12000, scoped, tag = 'internal scratch']
  #allocation2 [shape = 'f32[272,128]{1,0:T(8,128)}', space=vmem, size = 0x22000, scoped, tag = 'scratch operand']
  %s0 = inlined_call_operand.hbm [shape: f32[2,4,352], index: 0, kind: input, shape index: {}]
  %s1 = inlined_call_operand.hbm [shape: f32[8,272], index: 1, kind: input, shape index: {}]
  %s2 = inlined_call_operand.vmem [shape: f32[8,1], index: 2, kind: input, shape index: {}]
  %s3 = inlined_call_operand.hbm [shape: f32[1,8,128], index: 3, kind: output, shape index: {}]
  %s4 = sld [smem:[#allocation0]]
  $region30: #{tpu_custom_call.1} parent=0
    _
  %s6 = ssub.s32 1, %s4
  %s7 = scalar_select 0, %s6, %s4
  $region1: #{tpu_custom_call.1} parent=0
    #allocation3 [shape = 'u8[12288]{0}', space=vmem, size = 0x3000, scoped, tag = 'input window, operand 0, single buffered']
    #allocation4 [shape = 's32[1]{0}', space=sflag, size = 0x4, scoped, tag = 'scoped memory for tpu_custom_call.1']
    #allocation5 [shape = 's32[1]{0}', space=sflag, size = 0x4, scoped, tag = 'scoped memory for tpu_custom_call.1']
    #allocation6 [shape = 'u8[12288]{0}', space=vmem, size = 0x3000, scoped, tag = 'input window, operand 1, single buffered']
    #allocation7 [shape = 's32[1]{0}', space=sflag, size = 0x4, scoped, tag = 'scoped memory for tpu_custom_call.1']
    #allocation8 [shape = 'u8[4096]{0}', space=vmem, size = 0x1000, scoped, tag = 'output window, operand 0, single buffered']
    %8 = vsyncpa [#allocation4], 0
    %9 = vsyncpa [#allocation7], 0
    %10 = vsyncpa [#allocation5], 0
    // Predicated region
    $region2: #{tpu_custom_call.1} parent=1 // pred_check
      _
    $region3: #{tpu_custom_call.1} parent=1 // pred_check_branch
      %12 = sbr.rel (0) target = $region5
    $region4: #{tpu_custom_call.1} parent=1 // pred_region
      %s14 = ssub.s32 384, 384
      %15 = vsyncadd [#allocation4], %s14
      %s16 = sshll.u32 [#allocation3], 4
      %s17 = int_to_ptr.vmem [resolvable:$true] %s16
      %22 = dma.hbm_to_vmem [thread:$0]  %s0, 384, %s17, [#allocation4], 192, 192, 12
    $region5: #{tpu_custom_call.1} parent=1 // pred_fallthru
      _
    // Predicated region
    $region6: #{tpu_custom_call.1} parent=1 // pred_check
      _
    $region7: #{tpu_custom_call.1} parent=1 // pred_check_branch
      %24 = sbr.rel (0) target = $region9
    $region8: #{tpu_custom_call.1} parent=1 // pred_region
      %s26 = ssub.s32 384, 384
      %27 = vsyncadd [#allocation7], %s26
      %s29 = sshll.u32 [#allocation6], 4
      %s30 = int_to_ptr.vmem [resolvable:$true] %s29
      %32 = dma.hbm_to_vmem [thread:$0]  %s1, 384, %s30, [#allocation7]
    $region9: #{tpu_custom_call.1} parent=1 // pred_fallthru
      _
    // Predicated region
    $region10: #{tpu_custom_call.1} parent=1 // pred_check
      _
    $region11: #{tpu_custom_call.1} parent=1 // pred_check_branch
      %34 = sbr.rel (0) target = $region13
    $region12: #{tpu_custom_call.1} parent=1 // pred_region
      _
    $region13: #{tpu_custom_call.1} parent=1 // pred_fallthru
      _
    // Predicated region
    $region14: #{tpu_custom_call.1} parent=1 // pred_check
      _
    $region15: #{tpu_custom_call.1} parent=1 // pred_check_branch
      %36 = sbr.rel (0) target = $region17
    $region16: #{tpu_custom_call.1} parent=1 // pred_region
      %37 = dma.done [#allocation4], 384
    $region17: #{tpu_custom_call.1} parent=1 // pred_fallthru
      _
    // Predicated region
    $region18: #{tpu_custom_call.1} parent=1 // pred_check
      _
    $region19: #{tpu_custom_call.1} parent=1 // pred_check_branch
      %39 = sbr.rel (0) target = $region21
    $region20: #{tpu_custom_call.1} parent=1 // pred_region
      %40 = dma.done [#allocation7], 384
    $region21: #{tpu_custom_call.1} parent=1 // pred_fallthru
      _
    %v41 = vld [vmem:[#allocation3] sm:$0xff]
    %v43 = vcombine.high %v41, %v41
    %44 = vrot.lane.b32.xlu0 %v41, 8
    %v45 = vpop.permute.xlu0 %44
    %46 = vrot.lane.b32.xlu0 %v43, 8
    %v47 = vpop.permute.xlu0 %46
    %vm48 = vcmask 64512
    %v49 = vsel %vm48, %v45, %v47
    %vm51 = vcmask 519168
    %52 = vst.msk [vmem:[#allocation2] sm:$0xf] %vm51, %v49
    %s53 = scalar_lea.vmem [#allocation3], 12
    %v54 = vld [vmem:[%s53] sm:$0xff]
    %v56 = vcombine.high %v54, %v54
    %57 = vrot.lane.b32.xlu0 %v54, 72
    %v58 = vpop.permute.xlu0 %57
    %59 = vrot.lane.b32.xlu0 %v56, 72
    %v60 = vpop.permute.xlu0 %59
    %vm61 = vcmask 588800
    %v62 = vsel %vm61, %v58, %v60
    %vm64 = vcmask 1043968
    %65 = vst.msk [vmem:[#allocation2] sm:$0xf] %vm64, %v62
    %v66 = vld [vmem:[#allocation3] sm:$0xff]
    %v68 = vcombine.high %v66, %v66
    %69 = vrot.lane.b32.xlu0 %v66, 7
    %v70 = vpop.permute.xlu0 %69
    %71 = vrot.lane.b32.xlu0 %v68, 7
    %v72 = vpop.permute.xlu0 %71
    %vm73 = vcmask 56320
    %v74 = vsel %vm73, %v70, %v72
    %76 = vst.msk [vmem:[#allocation2 + $0x4] sm:$0xf] %vm51, %v74
    %v77 = vld [vmem:[%s53] sm:$0xff]
    %v79 = vcombine.high %v77, %v77
    %80 = vrot.lane.b32.xlu0 %v77, 71
    %v81 = vpop.permute.xlu0 %80
    %82 = vrot.lane.b32.xlu0 %v79, 71
    %v83 = vpop.permute.xlu0 %82
    %vm84 = vcmask 580608
    %v85 = vsel %vm84, %v81, %v83
    %87 = vst.msk [vmem:[#allocation2 + $0x4] sm:$0xf] %vm64, %v85
    %v88 = vld [vmem:[#allocation3] sm:$0xff]
    %v90 = vcombine.high %v88, %v88
    %91 = vrot.lane.b32.xlu0 %v88, 6
    %v92 = vpop.permute.xlu0 %91
    %93 = vrot.lane.b32.xlu0 %v90, 6
    %v94 = vpop.permute.xlu0 %93
    %vm95 = vcmask 48128
    %v96 = vsel %vm95, %v92, %v94
    %98 = vst.msk [vmem:[#allocation2 + $0x8] sm:$0xf] %vm51, %v96
    %v99 = vld [vmem:[%s53] sm:$0xff]
    %v101 = vcombine.high %v99, %v99
    %102 = vrot.lane.b32.xlu0 %v99, 70
    %v103 = vpop.permute.xlu0 %102
    %104 = vrot.lane.b32.xlu0 %v101, 70
    %v105 = vpop.permute.xlu0 %104
    %vm106 = vcmask 572416
    %v107 = vsel %vm106, %v103, %v105
    %109 = vst.msk [vmem:[#allocation2 + $0x8] sm:$0xf] %vm64, %v107
    %v110 = vld [vmem:[#allocation3] sm:$0xff]
    %v112 = vcombine.high %v110, %v110
    %113 = vrot.lane.b32.xlu0 %v110, 5
    %v114 = vpop.permute.xlu0 %113
    %115 = vrot.lane.b32.xlu0 %v112, 5
    %v116 = vpop.permute.xlu0 %115
    %vm117 = vcmask 39936
    %v118 = vsel %vm117, %v114, %v116
    %120 = vst.msk [vmem:[#allocation2 + $0xc] sm:$0xf] %vm51, %v118
    %v121 = vld [vmem:[%s53] sm:$0xff]
    %v123 = vcombine.high %v121, %v121
    %124 = vrot.lane.b32.xlu0 %v121, 69
    %v125 = vpop.permute.xlu0 %124
    %126 = vrot.lane.b32.xlu0 %v123, 69
    %v127 = vpop.permute.xlu0 %126
    %vm128 = vcmask 564224
    %v129 = vsel %vm128, %v125, %v127
    %131 = vst.msk [vmem:[#allocation2 + $0xc] sm:$0xf] %vm64, %v129
    %v132 = vld [vmem:[#allocation3] sm:$0xff]
    %v134 = vcombine.high %v132, %v132
    %135 = vrot.lane.b32.xlu0 %v132, 4
    %v136 = vpop.permute.xlu0 %135
    %137 = vrot.lane.b32.xlu0 %v134, 4
    %v138 = vpop.permute.xlu0 %137
    %vm139 = vcmask 31744
    %v140 = vsel %vm139, %v136, %v138
    %142 = vst.msk [vmem:[#allocation2 + $0x10] sm:$0xf] %vm51, %v140
    %v143 = vld [vmem:[%s53] sm:$0xff]
    %v145 = vcombine.high %v143, %v143
    %146 = vrot.lane.b32.xlu0 %v143, 68
    %v147 = vpop.permute.xlu0 %146
    %148 = vrot.lane.b32.xlu0 %v145, 68
    %v149 = vpop.permute.xlu0 %148
    %vm150 = vcmask 556032
    %v151 = vsel %vm150, %v147, %v149
    %153 = vst.msk [vmem:[#allocation2 + $0x10] sm:$0xf] %vm64, %v151
    %v154 = vld [vmem:[#allocation3] sm:$0xff]
    %v156 = vcombine.high %v154, %v154
    %157 = vrot.lane.b32.xlu0 %v154, 3
    %v158 = vpop.permute.xlu0 %157
    %159 = vrot.lane.b32.xlu0 %v156, 3
    %v160 = vpop.permute.xlu0 %159
    %vm161 = vcmask 23552
    %v162 = vsel %vm161, %v158, %v160
    %164 = vst.msk [vmem:[#allocation2 + $0x14] sm:$0xf] %vm51, %v162
    %v165 = vld [vmem:[%s53] sm:$0xff]
    %v167 = vcombine.high %v165, %v165
    %168 = vrot.lane.b32.xlu0 %v165, 67
    %v169 = vpop.permute.xlu0 %168
    %170 = vrot.lane.b32.xlu0 %v167, 67
    %v171 = vpop.permute.xlu0 %170
    %vm172 = vcmask 547840
    %v173 = vsel %vm172, %v169, %v171
    %175 = vst.msk [vmem:[#allocation2 + $0x14] sm:$0xf] %vm64, %v173
    %v176 = vld [vmem:[#allocation3] sm:$0xff]
    %v178 = vcombine.high %v176, %v176
    %179 = vrot.lane.b32.xlu0 %v176, 2
    %v180 = vpop.permute.xlu0 %179
    %181 = vrot.lane.b32.xlu0 %v178, 2
    %v182 = vpop.permute.xlu0 %181
    %vm183 = vcmask 15360
    %v184 = vsel %vm183, %v180, %v182
    %186 = vst.msk [vmem:[#allocation2 + $0x18] sm:$0xf] %vm51, %v184
    %v187 = vld [vmem:[%s53] sm:$0xff]
    %v189 = vcombine.high %v187, %v187
    %190 = vrot.lane.b32.xlu0 %v187, 66
    %v191 = vpop.permute.xlu0 %190
    %192 = vrot.lane.b32.xlu0 %v189, 66
    %v193 = vpop.permute.xlu0 %192
    %vm194 = vcmask 539648
    %v195 = vsel %vm194, %v191, %v193
    %197 = vst.msk [vmem:[#allocation2 + $0x18] sm:$0xf] %vm64, %v195
    %v198 = vld [vmem:[#allocation3] sm:$0xff]
    %v200 = vcombine.high %v198, %v198
    %201 = vrot.lane.b32.xlu0 %v198, 1
    %v202 = vpop.permute.xlu0 %201
    %203 = vrot.lane.b32.xlu0 %v200, 1
    %v204 = vpop.permute.xlu0 %203
    %vm205 = vcmask 7168
    %v206 = vsel %vm205, %v202, %v204
    %208 = vst.msk [vmem:[#allocation2 + $0x1c] sm:$0xf] %vm51, %v206
    %v209 = vld [vmem:[%s53] sm:$0xff]
    %v211 = vcombine.high %v209, %v209
    %212 = vrot.lane.b32.xlu0 %v209, 65
    %v213 = vpop.permute.xlu0 %212
    %214 = vrot.lane.b32.xlu0 %v211, 65
    %v215 = vpop.permute.xlu0 %214
    %vm216 = vcmask 531456
    %v217 = vsel %vm216, %v213, %v215
    %219 = vst.msk [vmem:[#allocation2 + $0x1c] sm:$0xf] %vm64, %v217
    %v220 = vld [vmem:[#allocation3 + $0x4] sm:$0xf]
    %221 = vst.msk [vmem:[#allocation2 + $0x20] sm:$0xf] %vm51, %v220
    %v222 = vld [vmem:[%s53 + $0x4] sm:$0xf]
    %224 = vrot.lane.b32.xlu0 %v222, 64
    %v225 = vpop.permute.xlu0 %224
    %227 = vst.msk [vmem:[#allocation2 + $0x20] sm:$0xf] %vm64, %v225
    %v228 = vld [vmem:[#allocation3 + $0x4] sm:$0xf]
    %230 = vrot.lane.b32.xlu0 %v228, 127
    %v231 = vpop.permute.xlu0 %230
    %233 = vst.msk [vmem:[#allocation2 + $0x24] sm:$0xf] %vm51, %v231
    %v234 = vld [vmem:[%s53 + $0x4] sm:$0xf]
    %236 = vrot.lane.b32.xlu0 %v234, 63
    %v237 = vpop.permute.xlu0 %236
    %239 = vst.msk [vmem:[#allocation2 + $0x24] sm:$0xf] %vm64, %v237
    %v240 = vld [vmem:[#allocation3 + $0x4] sm:$0xf]
    %242 = vrot.lane.b32.xlu0 %v240, 126
    %v243 = vpop.permute.xlu0 %242
    %245 = vst.msk [vmem:[#allocation2 + $0x28] sm:$0xf] %vm51, %v243
    %v246 = vld [vmem:[%s53 + $0x4] sm:$0xf]
    %248 = vrot.lane.b32.xlu0 %v246, 62
    %v249 = vpop.permute.xlu0 %248
    %251 = vst.msk [vmem:[#allocation2 + $0x28] sm:$0xf] %vm64, %v249
    %v252 = vld [vmem:[#allocation3 + $0x4] sm:$0xf]
    %254 = vrot.lane.b32.xlu0 %v252, 125
    %v255 = vpop.permute.xlu0 %254
    %257 = vst.msk [vmem:[#allocation2 + $0x2c] sm:$0xf] %vm51, %v255
    %v258 = vld [vmem:[%s53 + $0x4] sm:$0xf]
    %260 = vrot.lane.b32.xlu0 %v258, 61
    %v261 = vpop.permute.xlu0 %260
    %263 = vst.msk [vmem:[#allocation2 + $0x2c] sm:$0xf] %vm64, %v261
    %v264 = vld [vmem:[#allocation3 + $0x4] sm:$0xf]
    %266 = vrot.lane.b32.xlu0 %v264, 124
    %v267 = vpop.permute.xlu0 %266
    %269 = vst.msk [vmem:[#allocation2 + $0x30] sm:$0xf] %vm51, %v267
    %v270 = vld [vmem:[%s53 + $0x4] sm:$0xf]
    %272 = vrot.lane.b32.xlu0 %v270, 60
    %v273 = vpop.permute.xlu0 %272
    %275 = vst.msk [vmem:[#allocation2 + $0x30] sm:$0xf] %vm64, %v273
    %v276 = vld [vmem:[#allocation3 + $0x4] sm:$0xf]
    %278 = vrot.lane.b32.xlu0 %v276, 123
    %v279 = vpop.permute.xlu0 %278
    %281 = vst.msk [vmem:[#allocation2 + $0x34] sm:$0xf] %vm51, %v279
    %v282 = vld [vmem:[%s53 + $0x4] sm:$0xf]
    %284 = vrot.lane.b32.xlu0 %v282, 59
    %v285 = vpop.permute.xlu0 %284
    %287 = vst.msk [vmem:[#allocation2 + $0x34] sm:$0xf] %vm64, %v285
    %v288 = vld [vmem:[#allocation3 + $0x4] sm:$0xf]
    %290 = vrot.lane.b32.xlu0 %v288, 122
    %v291 = vpop.permute.xlu0 %290
    %293 = vst.msk [vmem:[#allocation2 + $0x38] sm:$0xf] %vm51, %v291
    %v294 = vld [vmem:[%s53 + $0x4] sm:$0xf]
    %296 = vrot.lane.b32.xlu0 %v294, 58
    %v297 = vpop.permute.xlu0 %296
    %299 = vst.msk [vmem:[#allocation2 + $0x38] sm:$0xf] %vm64, %v297
    %v300 = vld [vmem:[#allocation3 + $0x4] sm:$0xf]
    %302 = vrot.lane.b32.xlu0 %v300, 121
    %v303 = vpop.permute.xlu0 %302
    %305 = vst.msk [vmem:[#allocation2 + $0x3c] sm:$0xf] %vm51, %v303
    %v306 = vld [vmem:[%s53 + $0x4] sm:$0xf]
    %308 = vrot.lane.b32.xlu0 %v306, 57
    %v309 = vpop.permute.xlu0 %308
    %311 = vst.msk [vmem:[#allocation2 + $0x3c] sm:$0xf] %vm64, %v309
    %v312 = vld [vmem:[#allocation3 + $0x4] sm:$0xf]
    %314 = vrot.lane.b32.xlu0 %v312, 120
    %v315 = vpop.permute.xlu0 %314
    %317 = vst.msk [vmem:[#allocation2 + $0x40] sm:$0xf] %vm51, %v315
    %v318 = vld [vmem:[%s53 + $0x4] sm:$0xf]
    %320 = vrot.lane.b32.xlu0 %v318, 56
    %v321 = vpop.permute.xlu0 %320
    %323 = vst.msk [vmem:[#allocation2 + $0x40] sm:$0xf] %vm64, %v321
    %v324 = vld [vmem:[#allocation3 + $0x4] sm:$0xf]
    %326 = vrot.lane.b32.xlu0 %v324, 119
    %v327 = vpop.permute.xlu0 %326
    %329 = vst.msk [vmem:[#allocation2 + $0x44] sm:$0xf] %vm51, %v327
    %v330 = vld [vmem:[%s53 + $0x4] sm:$0xf]
    %332 = vrot.lane.b32.xlu0 %v330, 55
    %v333 = vpop.permute.xlu0 %332
    %335 = vst.msk [vmem:[#allocation2 + $0x44] sm:$0xf] %vm64, %v333
    %v336 = vld [vmem:[#allocation3 + $0x4] sm:$0xf]
    %338 = vrot.lane.b32.xlu0 %v336, 118
    %v339 = vpop.permute.xlu0 %338
    %341 = vst.msk [vmem:[#allocation2 + $0x48] sm:$0xf] %vm51, %v339
    %v342 = vld [vmem:[%s53 + $0x4] sm:$0xf]
    %344 = vrot.lane.b32.xlu0 %v342, 54
    %v345 = vpop.permute.xlu0 %344
    %347 = vst.msk [vmem:[#allocation2 + $0x48] sm:$0xf] %vm64, %v345
    %v348 = vld [vmem:[#allocation3 + $0x4] sm:$0xf]
    %350 = vrot.lane.b32.xlu0 %v348, 117
    %v351 = vpop.permute.xlu0 %350
    %353 = vst.msk [vmem:[#allocation2 + $0x4c] sm:$0xf] %vm51, %v351
    %v354 = vld [vmem:[%s53 + $0x4] sm:$0xf]
    %356 = vrot.lane.b32.xlu0 %v354, 53
    %v357 = vpop.permute.xlu0 %356
    %359 = vst.msk [vmem:[#allocation2 + $0x4c] sm:$0xf] %vm64, %v357
    %v360 = vld [vmem:[#allocation3 + $0x4] sm:$0xf]
    %362 = vrot.lane.b32.xlu0 %v360, 116
    %v363 = vpop.permute.xlu0 %362
    %365 = vst.msk [vmem:[#allocation2 + $0x50] sm:$0xf] %vm51, %v363
    %v366 = vld [vmem:[%s53 + $0x4] sm:$0xf]
    %368 = vrot.lane.b32.xlu0 %v366, 52
    %v369 = vpop.permute.xlu0 %368
    %371 = vst.msk [vmem:[#allocation2 + $0x50] sm:$0xf] %vm64, %v369
    %v372 = vld [vmem:[#allocation3 + $0x4] sm:$0xf]
    %374 = vrot.lane.b32.xlu0 %v372, 115
    %v375 = vpop.permute.xlu0 %374
    %377 = vst.msk [vmem:[#allocation2 + $0x54] sm:$0xf] %vm51, %v375
    %v378 = vld [vmem:[%s53 + $0x4] sm:$0xf]
    %380 = vrot.lane.b32.xlu0 %v378, 51
    %v381 = vpop.permute.xlu0 %380
    %383 = vst.msk [vmem:[#allocation2 + $0x54] sm:$0xf] %vm64, %v381
    %v384 = vld [vmem:[#allocation3 + $0x4] sm:$0xf]
    %386 = vrot.lane.b32.xlu0 %v384, 114
    %v387 = vpop.permute.xlu0 %386
    %389 = vst.msk [vmem:[#allocation2 + $0x58] sm:$0xf] %vm51, %v387
    %v390 = vld [vmem:[%s53 + $0x4] sm:$0xf]
    %392 = vrot.lane.b32.xlu0 %v390, 50
    %v393 = vpop.permute.xlu0 %392
    %395 = vst.msk [vmem:[#allocation2 + $0x58] sm:$0xf] %vm64, %v393
    %v396 = vld [vmem:[#allocation3 + $0x4] sm:$0xf]
    %398 = vrot.lane.b32.xlu0 %v396, 113
    %v399 = vpop.permute.xlu0 %398
    %401 = vst.msk [vmem:[#allocation2 + $0x5c] sm:$0xf] %vm51, %v399
    %v402 = vld [vmem:[%s53 + $0x4] sm:$0xf]
    %404 = vrot.lane.b32.xlu0 %v402, 49
    %v405 = vpop.permute.xlu0 %404
    %407 = vst.msk [vmem:[#allocation2 + $0x5c] sm:$0xf] %vm64, %v405
    %v408 = vld [vmem:[#allocation3 + $0x4] sm:$0xf]
    %410 = vrot.lane.b32.xlu0 %v408, 112
    %v411 = vpop.permute.xlu0 %410
    %413 = vst.msk [vmem:[#allocation2 + $0x60] sm:$0xf] %vm51, %v411
    %v414 = vld [vmem:[%s53 + $0x4] sm:$0xf]
    %416 = vrot.lane.b32.xlu0 %v414, 48
    %v417 = vpop.permute.xlu0 %416
    %419 = vst.msk [vmem:[#allocation2 + $0x60] sm:$0xf] %vm64, %v417
    %v420 = vld [vmem:[#allocation3 + $0x4] sm:$0xf]
    %422 = vrot.lane.b32.xlu0 %v420, 111
    %v423 = vpop.permute.xlu0 %422
    %425 = vst.msk [vmem:[#allocation2 + $0x64] sm:$0xf] %vm51, %v423
    %v426 = vld [vmem:[%s53 + $0x4] sm:$0xf]
    %428 = vrot.lane.b32.xlu0 %v426, 47
    %v429 = vpop.permute.xlu0 %428
    %431 = vst.msk [vmem:[#allocation2 + $0x64] sm:$0xf] %vm64, %v429
    %v432 = vld [vmem:[#allocation3 + $0x4] sm:$0xf]
    %434 = vrot.lane.b32.xlu0 %v432, 110
    %v435 = vpop.permute.xlu0 %434
    %437 = vst.msk [vmem:[#allocation2 + $0x68] sm:$0xf] %vm51, %v435
    %v438 = vld [vmem:[%s53 + $0x4] sm:$0xf]
    %440 = vrot.lane.b32.xlu0 %v438, 46
    %v441 = vpop.permute.xlu0 %440
    %443 = vst.msk [vmem:[#allocation2 + $0x68] sm:$0xf] %vm64, %v441
    %v444 = vld [vmem:[#allocation3 + $0x4] sm:$0xf]
    %446 = vrot.lane.b32.xlu0 %v444, 109
    %v447 = vpop.permute.xlu0 %446
    %449 = vst.msk [vmem:[#allocation2 + $0x6c] sm:$0xf] %vm51, %v447
    %v450 = vld [vmem:[%s53 + $0x4] sm:$0xf]
    %452 = vrot.lane.b32.xlu0 %v450, 45
    %v453 = vpop.permute.xlu0 %452
    %455 = vst.msk [vmem:[#allocation2 + $0x6c] sm:$0xf] %vm64, %v453
    %v456 = vld [vmem:[#allocation3 + $0x4] sm:$0xf]
    %458 = vrot.lane.b32.xlu0 %v456, 108
    %v459 = vpop.permute.xlu0 %458
    %461 = vst.msk [vmem:[#allocation2 + $0x70] sm:$0xf] %vm51, %v459
    %v462 = vld [vmem:[%s53 + $0x4] sm:$0xf]
    %464 = vrot.lane.b32.xlu0 %v462, 44
    %v465 = vpop.permute.xlu0 %464
    %467 = vst.msk [vmem:[#allocation2 + $0x70] sm:$0xf] %vm64, %v465
    %v468 = vld [vmem:[#allocation3 + $0x4] sm:$0xf]
    %470 = vrot.lane.b32.xlu0 %v468, 107
    %v471 = vpop.permute.xlu0 %470
    %473 = vst.msk [vmem:[#allocation2 + $0x74] sm:$0xf] %vm51, %v471
    %v474 = vld [vmem:[%s53 + $0x4] sm:$0xf]
    %476 = vrot.lane.b32.xlu0 %v474, 43
    %v477 = vpop.permute.xlu0 %476
    %479 = vst.msk [vmem:[#allocation2 + $0x74] sm:$0xf] %vm64, %v477
    %v480 = vld [vmem:[#allocation3 + $0x4] sm:$0xf]
    %482 = vrot.lane.b32.xlu0 %v480, 106
    %v483 = vpop.permute.xlu0 %482
    %485 = vst.msk [vmem:[#allocation2 + $0x78] sm:$0xf] %vm51, %v483
    %v486 = vld [vmem:[%s53 + $0x4] sm:$0xf]
    %488 = vrot.lane.b32.xlu0 %v486, 42
    %v489 = vpop.permute.xlu0 %488
    %491 = vst.msk [vmem:[#allocation2 + $0x78] sm:$0xf] %vm64, %v489
    %v492 = vld [vmem:[#allocation3 + $0x4] sm:$0xf]
    %494 = vrot.lane.b32.xlu0 %v492, 105
    %v495 = vpop.permute.xlu0 %494
    %497 = vst.msk [vmem:[#allocation2 + $0x7c] sm:$0xf] %vm51, %v495
    %v498 = vld [vmem:[%s53 + $0x4] sm:$0xf]
    %500 = vrot.lane.b32.xlu0 %v498, 41
    %v501 = vpop.permute.xlu0 %500
    %503 = vst.msk [vmem:[#allocation2 + $0x7c] sm:$0xf] %vm64, %v501
    %v504 = vld [vmem:[#allocation3 + $0x4] sm:$0xf]
    %506 = vrot.lane.b32.xlu0 %v504, 104
    %v507 = vpop.permute.xlu0 %506
    %509 = vst.msk [vmem:[#allocation2 + $0x80] sm:$0xf] %vm51, %v507
    %v510 = vld [vmem:[%s53 + $0x4] sm:$0xf]
    %512 = vrot.lane.b32.xlu0 %v510, 40
    %v513 = vpop.permute.xlu0 %512
    %515 = vst.msk [vmem:[#allocation2 + $0x80] sm:$0xf] %vm64, %v513
    %v516 = vld [vmem:[#allocation3 + $0x4] sm:$0xf]
    %518 = vrot.lane.b32.xlu0 %v516, 103
    %v519 = vpop.permute.xlu0 %518
    %521 = vst.msk [vmem:[#allocation2 + $0x84] sm:$0xf] %vm51, %v519
    %v522 = vld [vmem:[%s53 + $0x4] sm:$0xf]
    %524 = vrot.lane.b32.xlu0 %v522, 39
    %v525 = vpop.permute.xlu0 %524
    %527 = vst.msk [vmem:[#allocation2 + $0x84] sm:$0xf] %vm64, %v525
    %v528 = vld [vmem:[#allocation3 + $0x4] sm:$0xf]
    %530 = vrot.lane.b32.xlu0 %v528, 102
    %v531 = vpop.permute.xlu0 %530
    %533 = vst.msk [vmem:[#allocation2 + $0x88] sm:$0xf] %vm51, %v531
    %v534 = vld [vmem:[%s53 + $0x4] sm:$0xf]
    %536 = vrot.lane.b32.xlu0 %v534, 38
    %v537 = vpop.permute.xlu0 %536
    %539 = vst.msk [vmem:[#allocation2 + $0x88] sm:$0xf] %vm64, %v537
    %v540 = vld [vmem:[#allocation3 + $0x4] sm:$0xf]
    %542 = vrot.lane.b32.xlu0 %v540, 101
    %v543 = vpop.permute.xlu0 %542
    %545 = vst.msk [vmem:[#allocation2 + $0x8c] sm:$0xf] %vm51, %v543
    %v546 = vld [vmem:[%s53 + $0x4] sm:$0xf]
    %548 = vrot.lane.b32.xlu0 %v546, 37
    %v549 = vpop.permute.xlu0 %548
    %551 = vst.msk [vmem:[#allocation2 + $0x8c] sm:$0xf] %vm64, %v549
    %v552 = vld [vmem:[#allocation3 + $0x4] sm:$0xf]
    %554 = vrot.lane.b32.xlu0 %v552, 100
    %v555 = vpop.permute.xlu0 %554
    %557 = vst.msk [vmem:[#allocation2 + $0x90] sm:$0xf] %vm51, %v555
    %v558 = vld [vmem:[%s53 + $0x4] sm:$0xf]
    %560 = vrot.lane.b32.xlu0 %v558, 36
    %v561 = vpop.permute.xlu0 %560
    %563 = vst.msk [vmem:[#allocation2 + $0x90] sm:$0xf] %vm64, %v561
    %v564 = vld [vmem:[#allocation3 + $0x4] sm:$0xf]
    %566 = vrot.lane.b32.xlu0 %v564, 99
    %v567 = vpop.permute.xlu0 %566
    %569 = vst.msk [vmem:[#allocation2 + $0x94] sm:$0xf] %vm51, %v567
    %v570 = vld [vmem:[%s53 + $0x4] sm:$0xf]
    %572 = vrot.lane.b32.xlu0 %v570, 35
    %v573 = vpop.permute.xlu0 %572
    %575 = vst.msk [vmem:[#allocation2 + $0x94] sm:$0xf] %vm64, %v573
    %v576 = vld [vmem:[#allocation3 + $0x4] sm:$0xf]
    %578 = vrot.lane.b32.xlu0 %v576, 98
    %v579 = vpop.permute.xlu0 %578
    %581 = vst.msk [vmem:[#allocation2 + $0x98] sm:$0xf] %vm51, %v579
    %v582 = vld [vmem:[%s53 + $0x4] sm:$0xf]
    %584 = vrot.lane.b32.xlu0 %v582, 34
    %v585 = vpop.permute.xlu0 %584
    %587 = vst.msk [vmem:[#allocation2 + $0x98] sm:$0xf] %vm64, %v585
    %v588 = vld [vmem:[#allocation3 + $0x4] sm:$0xf]
    %590 = vrot.lane.b32.xlu0 %v588, 97
    %v591 = vpop.permute.xlu0 %590
    %593 = vst.msk [vmem:[#allocation2 + $0x9c] sm:$0xf] %vm51, %v591
    %v594 = vld [vmem:[%s53 + $0x4] sm:$0xf]
    %596 = vrot.lane.b32.xlu0 %v594, 33
    %v597 = vpop.permute.xlu0 %596
    %599 = vst.msk [vmem:[#allocation2 + $0x9c] sm:$0xf] %vm64, %v597
    %v600 = vld [vmem:[#allocation3 + $0x4] sm:$0xf]
    %602 = vrot.lane.b32.xlu0 %v600, 96
    %v603 = vpop.permute.xlu0 %602
    %605 = vst.msk [vmem:[#allocation2 + $0xa0] sm:$0xf] %vm51, %v603
    %v606 = vld [vmem:[%s53 + $0x4] sm:$0xf]
    %608 = vrot.lane.b32.xlu0 %v606, 32
    %v609 = vpop.permute.xlu0 %608
    %611 = vst.msk [vmem:[#allocation2 + $0xa0] sm:$0xf] %vm64, %v609
    %v612 = vld [vmem:[#allocation3 + $0x4] sm:$0xf]
    %614 = vrot.lane.b32.xlu0 %v612, 95
    %v615 = vpop.permute.xlu0 %614
    %617 = vst.msk [vmem:[#allocation2 + $0xa4] sm:$0xf] %vm51, %v615
    %v618 = vld [vmem:[%s53 + $0x4] sm:$0xf]
    %620 = vrot.lane.b32.xlu0 %v618, 31
    %v621 = vpop.permute.xlu0 %620
    %623 = vst.msk [vmem:[#allocation2 + $0xa4] sm:$0xf] %vm64, %v621
    %v624 = vld [vmem:[#allocation3 + $0x4] sm:$0xf]
    %626 = vrot.lane.b32.xlu0 %v624, 94
    %v627 = vpop.permute.xlu0 %626
    %629 = vst.msk [vmem:[#allocation2 + $0xa8] sm:$0xf] %vm51, %v627
    %v630 = vld [vmem:[%s53 + $0x4] sm:$0xf]
    %632 = vrot.lane.b32.xlu0 %v630, 30
    %v633 = vpop.permute.xlu0 %632
    %635 = vst.msk [vmem:[#allocation2 + $0xa8] sm:$0xf] %vm64, %v633
    %v636 = vld [vmem:[#allocation3 + $0x4] sm:$0xf]
    %638 = vrot.lane.b32.xlu0 %v636, 93
    %v639 = vpop.permute.xlu0 %638
    %641 = vst.msk [vmem:[#allocation2 + $0xac] sm:$0xf] %vm51, %v639
    %v642 = vld [vmem:[%s53 + $0x4] sm:$0xf]
    %644 = vrot.lane.b32.xlu0 %v642, 29
    %v645 = vpop.permute.xlu0 %644
    %647 = vst.msk [vmem:[#allocation2 + $0xac] sm:$0xf] %vm64, %v645
    %v648 = vld [vmem:[#allocation3 + $0x4] sm:$0xf]
    %650 = vrot.lane.b32.xlu0 %v648, 92
    %v651 = vpop.permute.xlu0 %650
    %653 = vst.msk [vmem:[#allocation2 + $0xb0] sm:$0xf] %vm51, %v651
    %v654 = vld [vmem:[%s53 + $0x4] sm:$0xf]
    %656 = vrot.lane.b32.xlu0 %v654, 28
    %v657 = vpop.permute.xlu0 %656
    %659 = vst.msk [vmem:[#allocation2 + $0xb0] sm:$0xf] %vm64, %v657
    %v660 = vld [vmem:[#allocation3 + $0x4] sm:$0xf]
    %662 = vrot.lane.b32.xlu0 %v660, 91
    %v663 = vpop.permute.xlu0 %662
    %665 = vst.msk [vmem:[#allocation2 + $0xb4] sm:$0xf] %vm51, %v663
    %v666 = vld [vmem:[%s53 + $0x4] sm:$0xf]
    %668 = vrot.lane.b32.xlu0 %v666, 27
    %v669 = vpop.permute.xlu0 %668
    %671 = vst.msk [vmem:[#allocation2 + $0xb4] sm:$0xf] %vm64, %v669
    %v672 = vld [vmem:[#allocation3 + $0x4] sm:$0xf]
    %674 = vrot.lane.b32.xlu0 %v672, 90
    %v675 = vpop.permute.xlu0 %674
    %677 = vst.msk [vmem:[#allocation2 + $0xb8] sm:$0xf] %vm51, %v675
    %v678 = vld [vmem:[%s53 + $0x4] sm:$0xf]
    %680 = vrot.lane.b32.xlu0 %v678, 26
    %v681 = vpop.permute.xlu0 %680
    %683 = vst.msk [vmem:[#allocation2 + $0xb8] sm:$0xf] %vm64, %v681
    %v684 = vld [vmem:[#allocation3 + $0x4] sm:$0xf]
    %686 = vrot.lane.b32.xlu0 %v684, 89
    %v687 = vpop.permute.xlu0 %686
    %689 = vst.msk [vmem:[#allocation2 + $0xbc] sm:$0xf] %vm51, %v687
    %v690 = vld [vmem:[%s53 + $0x4] sm:$0xf]
    %692 = vrot.lane.b32.xlu0 %v690, 25
    %v693 = vpop.permute.xlu0 %692
    %695 = vst.msk [vmem:[#allocation2 + $0xbc] sm:$0xf] %vm64, %v693
    %v696 = vld [vmem:[#allocation3 + $0x4] sm:$0xf]
    %698 = vrot.lane.b32.xlu0 %v696, 88
    %v699 = vpop.permute.xlu0 %698
    %701 = vst.msk [vmem:[#allocation2 + $0xc0] sm:$0xf] %vm51, %v699
    %v702 = vld [vmem:[%s53 + $0x4] sm:$0xf]
    %704 = vrot.lane.b32.xlu0 %v702, 24
    %v705 = vpop.permute.xlu0 %704
    %707 = vst.msk [vmem:[#allocation2 + $0xc0] sm:$0xf] %vm64, %v705
    %v708 = vld [vmem:[#allocation3] sm:$0xf]
    %709 = vst.msk [vmem:[#allocation2 + $0xc4] sm:$0xf] %vm51, %v708
    %v710 = vld [vmem:[%s53] sm:$0xf]
    %712 = vrot.lane.b32.xlu0 %v710, 64
    %v713 = vpop.permute.xlu0 %712
    %715 = vst.msk [vmem:[#allocation2 + $0xc4] sm:$0xf] %vm64, %v713
    %v716 = vld [vmem:[#allocation3] sm:$0xf]
    %718 = vrot.lane.b32.xlu0 %v716, 80
    %v719 = vpop.permute.xlu0 %718
    %721 = vst.msk [vmem:[#allocation2 + $0xc8] sm:$0xf] %vm51, %v719
    %v722 = vld [vmem:[%s53] sm:$0xf]
    %724 = vrot.lane.b32.xlu0 %v722, 16
    %v725 = vpop.permute.xlu0 %724
    %727 = vst.msk [vmem:[#allocation2 + $0xc8] sm:$0xf] %vm64, %v725
    %v728 = vld [vmem:[#allocation3] sm:$0xff]
    %v730 = vcombine.high %v728, %v728
    %731 = vrot.lane.b32.xlu0 %v728, 32
    %v732 = vpop.permute.xlu0 %731
    %733 = vrot.lane.b32.xlu0 %v730, 32
    %v734 = vpop.permute.xlu0 %733
    %vm735 = vcmask 261120
    %v736 = vsel %vm735, %v732, %v734
    %738 = vst.msk [vmem:[#allocation2 + $0xcc] sm:$0xf] %vm51, %v736
    %v739 = vld [vmem:[%s53] sm:$0xff]
    %v741 = vcombine.high %v739, %v739
    %742 = vrot.lane.b32.xlu0 %v739, 96
    %v743 = vpop.permute.xlu0 %742
    %744 = vrot.lane.b32.xlu0 %v741, 96
    %v745 = vpop.permute.xlu0 %744
    %vm746 = vcmask 785408
    %v747 = vsel %vm746, %v743, %v745
    %749 = vst.msk [vmem:[#allocation2 + $0xcc] sm:$0xf] %vm64, %v747
    %v750 = vld [vmem:[#allocation3 + $0x4] sm:$0xf]
    %752 = vrot.lane.b32.xlu0 %v750, 112
    %v753 = vpop.permute.xlu0 %752
    %755 = vst.msk [vmem:[#allocation2 + $0xd0] sm:$0xf] %vm51, %v753
    %v756 = vld [vmem:[%s53 + $0x4] sm:$0xf]
    %758 = vrot.lane.b32.xlu0 %v756, 48
    %v759 = vpop.permute.xlu0 %758
    %761 = vst.msk [vmem:[#allocation2 + $0xd0] sm:$0xf] %vm64, %v759
    %v762 = vld [vmem:[#allocation3 + $0x4] sm:$0xf]
    %764 = vrot.lane.b32.xlu0 %v762, 64
    %v765 = vpop.permute.xlu0 %764
    %767 = vst.msk [vmem:[#allocation2 + $0xd4] sm:$0xf] %vm51, %v765
    %v768 = vld [vmem:[%s53 + $0x4] sm:$0xf]
    %769 = vst.msk [vmem:[#allocation2 + $0xd4] sm:$0xf] %vm64, %v768
    %v770 = vld [vmem:[#allocation3 + $0x4] sm:$0xff]
    %v772 = vcombine.high %v770, %v770
    %773 = vrot.lane.b32.xlu0 %v770, 16
    %v774 = vpop.permute.xlu0 %773
    %775 = vrot.lane.b32.xlu0 %v772, 16
    %v776 = vpop.permute.xlu0 %775
    %vm777 = vcmask 130048
    %v778 = vsel %vm777, %v774, %v776
    %780 = vst.msk [vmem:[#allocation2 + $0xd8] sm:$0xf] %vm51, %v778
    %v781 = vld [vmem:[%s53 + $0x4] sm:$0xff]
    %v783 = vcombine.high %v781, %v781
    %784 = vrot.lane.b32.xlu0 %v781, 80
    %v785 = vpop.permute.xlu0 %784
    %786 = vrot.lane.b32.xlu0 %v783, 80
    %v787 = vpop.permute.xlu0 %786
    %vm788 = vcmask 654336
    %v789 = vsel %vm788, %v785, %v787
    %791 = vst.msk [vmem:[#allocation2 + $0xd8] sm:$0xf] %vm64, %v789
    %v792 = vld [vmem:[#allocation3 + $0x8] sm:$0xf]
    %794 = vrot.lane.b32.xlu0 %v792, 96
    %v795 = vpop.permute.xlu0 %794
    %797 = vst.msk [vmem:[#allocation2 + $0xdc] sm:$0xf] %vm51, %v795
    %v798 = vld [vmem:[%s53 + $0x8] sm:$0xf]
    %800 = vrot.lane.b32.xlu0 %v798, 32
    %v801 = vpop.permute.xlu0 %800
    %803 = vst.msk [vmem:[#allocation2 + $0xdc] sm:$0xf] %vm64, %v801
    %v804 = vld [vmem:[#allocation3] sm:$0xff]
    %v806 = vcombine.high %v804, %v804
    %807 = vrot.lane.b32.xlu0 %v804, 24
    %v808 = vpop.permute.xlu0 %807
    %809 = vrot.lane.b32.xlu0 %v806, 24
    %v810 = vpop.permute.xlu0 %809
    %vm811 = vcmask 195584
    %v812 = vsel %vm811, %v808, %v810
    %814 = vst.msk [vmem:[#allocation2 + $0xe0] sm:$0xf] %vm51, %v812
    %v815 = vld [vmem:[%s53] sm:$0xff]
    %v817 = vcombine.high %v815, %v815
    %818 = vrot.lane.b32.xlu0 %v815, 88
    %v819 = vpop.permute.xlu0 %818
    %820 = vrot.lane.b32.xlu0 %v817, 88
    %v821 = vpop.permute.xlu0 %820
    %vm822 = vcmask 719872
    %v823 = vsel %vm822, %v819, %v821
    %825 = vst.msk [vmem:[#allocation2 + $0xe0] sm:$0xf] %vm64, %v823
    %v826 = vld [vmem:[#allocation3] sm:$0xff]
    %v828 = vcombine.high %v826, %v826
    %829 = vrot.lane.b32.xlu0 %v826, 8
    %v830 = vpop.permute.xlu0 %829
    %831 = vrot.lane.b32.xlu0 %v828, 8
    %v832 = vpop.permute.xlu0 %831
    %v833 = vsel %vm48, %v830, %v832
    %835 = vst.msk [vmem:[#allocation2 + $0xe4] sm:$0xf] %vm51, %v833
    %v836 = vld [vmem:[%s53] sm:$0xff]
    %v838 = vcombine.high %v836, %v836
    %839 = vrot.lane.b32.xlu0 %v836, 72
    %v840 = vpop.permute.xlu0 %839
    %841 = vrot.lane.b32.xlu0 %v838, 72
    %v842 = vpop.permute.xlu0 %841
    %v843 = vsel %vm61, %v840, %v842
    %845 = vst.msk [vmem:[#allocation2 + $0xe4] sm:$0xf] %vm64, %v843
    %v846 = vld [vmem:[#allocation3 + $0x4] sm:$0xf]
    %848 = vrot.lane.b32.xlu0 %v846, 120
    %v849 = vpop.permute.xlu0 %848
    %851 = vst.msk [vmem:[#allocation2 + $0xe8] sm:$0xf] %vm51, %v849
    %v852 = vld [vmem:[%s53 + $0x4] sm:$0xf]
    %854 = vrot.lane.b32.xlu0 %v852, 56
    %v855 = vpop.permute.xlu0 %854
    %857 = vst.msk [vmem:[#allocation2 + $0xe8] sm:$0xf] %vm64, %v855
    %v858 = vld [vmem:[#allocation3 + $0x4] sm:$0xf]
    %860 = vrot.lane.b32.xlu0 %v858, 104
    %v861 = vpop.permute.xlu0 %860
    %863 = vst.msk [vmem:[#allocation2 + $0xec] sm:$0xf] %vm51, %v861
    %v864 = vld [vmem:[%s53 + $0x4] sm:$0xf]
    %866 = vrot.lane.b32.xlu0 %v864, 40
    %v867 = vpop.permute.xlu0 %866
    %869 = vst.msk [vmem:[#allocation2 + $0xec] sm:$0xf] %vm64, %v867
    %v870 = vld [vmem:[#allocation3 + $0x4] sm:$0xf]
    %872 = vrot.lane.b32.xlu0 %v870, 88
    %v873 = vpop.permute.xlu0 %872
    %875 = vst.msk [vmem:[#allocation2 + $0xf0] sm:$0xf] %vm51, %v873
    %v876 = vld [vmem:[%s53 + $0x4] sm:$0xf]
    %878 = vrot.lane.b32.xlu0 %v876, 24
    %v879 = vpop.permute.xlu0 %878
    %881 = vst.msk [vmem:[#allocation2 + $0xf0] sm:$0xf] %vm64, %v879
    %v882 = vld [vmem:[#allocation3 + $0x4] sm:$0xf]
    %884 = vrot.lane.b32.xlu0 %v882, 72
    %v885 = vpop.permute.xlu0 %884
    %887 = vst.msk [vmem:[#allocation2 + $0xf4] sm:$0xf] %vm51, %v885
    %v888 = vld [vmem:[%s53 + $0x4] sm:$0xf]
    %890 = vrot.lane.b32.xlu0 %v888, 8
    %v891 = vpop.permute.xlu0 %890
    %893 = vst.msk [vmem:[#allocation2 + $0xf4] sm:$0xf] %vm64, %v891
    %v894 = vld [vmem:[#allocation3] sm:$0xff]
    %v896 = vcombine.high %v894, %v894
    %897 = vrot.lane.b32.xlu0 %v894, 4
    %v898 = vpop.permute.xlu0 %897
    %899 = vrot.lane.b32.xlu0 %v896, 4
    %v900 = vpop.permute.xlu0 %899
    %v901 = vsel %vm139, %v898, %v900
    %903 = vst.msk [vmem:[#allocation2 + $0xf8] sm:$0xf] %vm51, %v901
    %v904 = vld [vmem:[%s53] sm:$0xff]
    %v906 = vcombine.high %v904, %v904
    %907 = vrot.lane.b32.xlu0 %v904, 68
    %v908 = vpop.permute.xlu0 %907
    %909 = vrot.lane.b32.xlu0 %v906, 68
    %v910 = vpop.permute.xlu0 %909
    %v911 = vsel %vm150, %v908, %v910
    %913 = vst.msk [vmem:[#allocation2 + $0xf8] sm:$0xf] %vm64, %v911
    %v914 = vld [vmem:[#allocation3 + $0x4] sm:$0xf]
    %916 = vrot.lane.b32.xlu0 %v914, 124
    %v917 = vpop.permute.xlu0 %916
    %919 = vst.msk [vmem:[#allocation2 + $0xfc] sm:$0xf] %vm51, %v917
    %v920 = vld [vmem:[%s53 + $0x4] sm:$0xf]
    %922 = vrot.lane.b32.xlu0 %v920, 60
    %v923 = vpop.permute.xlu0 %922
    %925 = vst.msk [vmem:[#allocation2 + $0xfc] sm:$0xf] %vm64, %v923
    %v926 = vld [vmem:[#allocation3 + $0x4] sm:$0xf]
    %928 = vrot.lane.b32.xlu0 %v926, 116
    %v929 = vpop.permute.xlu0 %928
    %931 = vst.msk [vmem:[#allocation2 + $0x100] sm:$0xf] %vm51, %v929
    %v932 = vld [vmem:[%s53 + $0x4] sm:$0xf]
    %934 = vrot.lane.b32.xlu0 %v932, 52
    %v935 = vpop.permute.xlu0 %934
    %937 = vst.msk [vmem:[#allocation2 + $0x100] sm:$0xf] %vm64, %v935
    %v938 = vld [vmem:[#allocation3 + $0x4] sm:$0xf]
    %940 = vrot.lane.b32.xlu0 %v938, 108
    %v941 = vpop.permute.xlu0 %940
    %943 = vst.msk [vmem:[#allocation2 + $0x104] sm:$0xf] %vm51, %v941
    %v944 = vld [vmem:[%s53 + $0x4] sm:$0xf]
    %946 = vrot.lane.b32.xlu0 %v944, 44
    %v947 = vpop.permute.xlu0 %946
    %949 = vst.msk [vmem:[#allocation2 + $0x104] sm:$0xf] %vm64, %v947
    %v950 = vld [vmem:[#allocation3 + $0x4] sm:$0xf]
    %952 = vrot.lane.b32.xlu0 %v950, 100
    %v953 = vpop.permute.xlu0 %952
    %955 = vst.msk [vmem:[#allocation2 + $0x108] sm:$0xf] %vm51, %v953
    %v956 = vld [vmem:[%s53 + $0x4] sm:$0xf]
    %958 = vrot.lane.b32.xlu0 %v956, 36
    %v959 = vpop.permute.xlu0 %958
    %961 = vst.msk [vmem:[#allocation2 + $0x108] sm:$0xf] %vm64, %v959
    %v962 = vld [vmem:[#allocation3 + $0x4] sm:$0xf]
    %964 = vrot.lane.b32.xlu0 %v962, 92
    %v965 = vpop.permute.xlu0 %964
    %967 = vst.msk [vmem:[#allocation2 + $0x10c] sm:$0xf] %vm51, %v965
    %v968 = vld [vmem:[%s53 + $0x4] sm:$0xf]
    %970 = vrot.lane.b32.xlu0 %v968, 28
    %v971 = vpop.permute.xlu0 %970
    %973 = vst.msk [vmem:[#allocation2 + $0x10c] sm:$0xf] %vm64, %v971
    %v974 = vld [vmem:[#allocation6] sm:$0xff]
    %v975 = vld [vmem:[#allocation6 + $0x8] sm:$0xff]
    %v976 = vld [vmem:[#allocation6 + $0x10] sm:$0xff]
    %v977 = vld [vmem:[#allocation2] sm:$0xff]
    %v978 = vld [vmem:[#allocation2 + $0x8] sm:$0xff]
    %v979 = vld [vmem:[#allocation2 + $0x10] sm:$0xff]
    %v980 = vld [vmem:[#allocation2 + $0x18] sm:$0xff]
    %v981 = vld [vmem:[#allocation2 + $0x20] sm:$0xff]
    %v982 = vld [vmem:[#allocation2 + $0x28] sm:$0xff]
    %v983 = vld [vmem:[#allocation2 + $0x30] sm:$0xff]
    %v984 = vld [vmem:[#allocation2 + $0x38] sm:$0xff]
    %v985 = vld [vmem:[#allocation2 + $0x40] sm:$0xff]
    %v986 = vld [vmem:[#allocation2 + $0x48] sm:$0xff]
    %v987 = vld [vmem:[#allocation2 + $0x50] sm:$0xff]
    %v988 = vld [vmem:[#allocation2 + $0x58] sm:$0xff]
    %v989 = vld [vmem:[#allocation2 + $0x60] sm:$0xff]
    %v990 = vld [vmem:[#allocation2 + $0x68] sm:$0xff]
    %v991 = vld [vmem:[#allocation2 + $0x70] sm:$0xff]
    %v992 = vld [vmem:[#allocation2 + $0x78] sm:$0xff]
    %v993 = vld [vmem:[#allocation2 + $0x80] sm:$0xff]
    %v994 = vld [vmem:[#allocation2 + $0x88] sm:$0xff]
    %v995 = vld [vmem:[#allocation2 + $0x90] sm:$0xff]
    %v996 = vld [vmem:[#allocation2 + $0x98] sm:$0xff]
    %v997 = vld [vmem:[#allocation2 + $0xa0] sm:$0xff]
    %v998 = vld [vmem:[#allocation2 + $0xa8] sm:$0xff]
    %v999 = vld [vmem:[#allocation2 + $0xb0] sm:$0xff]
    %v1000 = vld [vmem:[#allocation2 + $0xb8] sm:$0xff]
    %v1001 = vld [vmem:[#allocation2 + $0xc0] sm:$0xff]
    %v1002 = vld [vmem:[#allocation2 + $0xc8] sm:$0xff]
    %v1003 = vld [vmem:[#allocation2 + $0xd0] sm:$0xff]
    %v1004 = vld [vmem:[#allocation2 + $0xd8] sm:$0xff]
    %v1005 = vld [vmem:[#allocation2 + $0xe0] sm:$0xff]
    %v1006 = vld [vmem:[#allocation2 + $0xe8] sm:$0xff]
    %v1007 = vld [vmem:[#allocation2 + $0xf0] sm:$0xff]
    %v1008 = vld [vmem:[#allocation2 + $0xf8] sm:$0xff]
    %v1009 = vld [vmem:[#allocation2 + $0x100] sm:$0xff]
    %v1010 = vld [vmem:[#allocation2 + $0x108] sm:$0xff]
    %v1011 = vld [vmem:[%s2] sm:$0xff]
    %1013 = vset.pattern.permute.xlu0 0
    %1014 = vperm.xlu0 %1013, %v1011
    %v1015 = vpop.permute.xlu0 %1014
    %v1018 = vsel %vm777, %v976, 0
    %1020 = vmatprep.subr.mxu0 0.0
    %1021 = vmatpush1.msra.mxu0 %v977
    %1022 = vmatprep.subr.mxu0 0.0
    %1023 = vmatpush1.msra.mxu0 %v978
    %1024 = vmatprep.subr.mxu0 0.0
    %1025 = vmatpush1.msra.mxu0 %v979
    %1026 = vmatprep.subr.mxu0 0.0
    %1027 = vmatpush1.msra.mxu0 %v980
    %1028 = vmatprep.subr.mxu0 0.0
    %1029 = vmatpush1.msra.mxu0 %v981
    %1030 = vmatprep.subr.mxu0 0.0
    %1031 = vmatpush1.msra.mxu0 %v982
    %1032 = vmatprep.subr.mxu0 0.0
    %1033 = vmatpush1.msra.mxu0 %v983
    %1034 = vmatprep.subr.mxu0 0.0
    %1035 = vmatpush1.msra.mxu0 %v984
    %1036 = vmatprep.subr.mxu0 0.0
    %1037 = vmatpush1.msra.mxu0 %v985
    %1038 = vmatprep.subr.mxu0 0.0
    %1039 = vmatpush1.msra.mxu0 %v986
    %1040 = vmatprep.subr.mxu0 0.0
    %1041 = vmatpush1.msra.mxu0 %v987
    %1042 = vmatprep.subr.mxu0 0.0
    %1043 = vmatpush1.msra.mxu0 %v988
    %1044 = vmatprep.subr.mxu0 0.0
    %1045 = vmatpush1.msra.mxu0 %v989
    %1046 = vmatprep.subr.mxu0 0.0
    %1047 = vmatpush1.msra.mxu0 %v990
    %1048 = vmatprep.subr.mxu0 0.0
    %1049 = vmatpush1.msra.mxu0 %v991
    %1050 = vmatprep.subr.mxu0 0.0
    %1051 = vmatpush1.msra.mxu0 %v992
    %1052 = vmatprep.subr.mxu0 0.0
    %1053 = vmatpush1.msra.mxu0 %v993
    %1054 = vmatprep.subr.mxu0 0.0
    %1055 = vmatpush1.msra.mxu0 %v994
    %1056 = vmatprep.subr.mxu0 0.0
    %1057 = vmatpush1.msra.mxu0 %v995
    %1058 = vmatprep.subr.mxu0 0.0
    %1059 = vmatpush1.msra.mxu0 %v996
    %1060 = vmatprep.subr.mxu0 0.0
    %1061 = vmatpush1.msra.mxu0 %v997
    %1062 = vmatprep.subr.mxu0 0.0
    %1063 = vmatpush1.msra.mxu0 %v998
    %1064 = vmatprep.subr.mxu0 0.0
    %1065 = vmatpush1.msra.mxu0 %v999
    %1066 = vmatprep.subr.mxu0 0.0
    %1067 = vmatpush1.msra.mxu0 %v1000
    %1068 = vmatprep.subr.mxu0 0.0
    %1069 = vmatpush1.msra.mxu0 %v1001
    %1070 = vmatprep.subr.mxu0 0.0
    %1071 = vmatpush1.msra.mxu0 %v1002
    %1072 = vmatprep.subr.mxu0 0.0
    %1073 = vmatpush1.msra.mxu0 %v1003
    %1074 = vmatprep.subr.mxu0 0.0
    %1075 = vmatpush1.msra.mxu0 %v1004
    %1076 = vmatprep.subr.mxu0 0.0
    %1077 = vmatpush1.msra.mxu0 %v1005
    %1078 = vmatprep.subr.mxu0 0.0
    %1079 = vmatpush1.msra.mxu0 %v1006
    %1080 = vmatprep.subr.mxu0 0.0
    %1081 = vmatpush1.msra.mxu0 %v1007
    %1082 = vmatprep.subr.mxu0 0.0
    %1083 = vmatpush1.msra.mxu0 %v1008
    %1084 = vmatprep.mubr.f32.mxu0 %v975
    %1085 = vmatmul.mubr.f32.gmra.mrb[0].mxu0 %v974
    %v1086 = vpop.f32.mrb[0].mxu0
    %v1087 = vadd.f32 %v1015, %v1086
    %v1088 = vpop.f32.mrb[0].mxu0
    %1089 = vdwg.mxu0
    %1090 = vmatprep.subr.mxu0 0.0
    %1091 = vmatpush1.msra.mxu0 %v1009
    %1092 = vmatprep.subr.mxu0 0.0
    %1093 = vmatpush1.msra.mxu0 %v1010
    %1094 = vmatprep.subr.mxu0 0.0
    %1095 = vmatpush1.msra.mxu0 0.0
    %1096 = vmatprep.subr.mxu0 0.0
    %1097 = vmatpush1.msra.mxu0 0.0
    %1098 = vmatprep.subr.mxu0 0.0
    %1099 = vmatpush1.msra.mxu0 0.0
    %1100 = vmatprep.subr.mxu0 0.0
    %1101 = vmatpush1.msra.mxu0 0.0
    %1102 = vmatprep.subr.mxu0 0.0
    %1103 = vmatpush1.msra.mxu0 0.0
    %1104 = vmatprep.subr.mxu0 0.0
    %1105 = vmatpush1.msra.mxu0 0.0
    %1106 = vmatprep.subr.mxu0 0.0
    %1107 = vmatpush1.msra.mxu0 0.0
    %1108 = vmatprep.subr.mxu0 0.0
    %1109 = vmatpush1.msra.mxu0 0.0
    %1110 = vmatprep.subr.mxu0 0.0
    %1111 = vmatpush1.msra.mxu0 0.0
    %1112 = vmatprep.subr.mxu0 0.0
    %1113 = vmatpush1.msra.mxu0 0.0
    %1114 = vmatprep.subr.mxu0 0.0
    %1115 = vmatpush1.msra.mxu0 0.0
    %1116 = vmatprep.subr.mxu0 0.0
    %1117 = vmatpush1.msra.mxu0 0.0
    %1118 = vmatprep.subr.mxu0 0.0
    %1119 = vmatpush1.msra.mxu0 0.0
    %1120 = vmatprep.subr.mxu0 0.0
    %1121 = vmatpush1.msra.mxu0 0.0
    %1122 = vmatprep.subr.mxu0 0.0
    %1123 = vmatpush1.msra.mxu0 0.0
    %1124 = vmatprep.subr.mxu0 0.0
    %1125 = vmatpush1.msra.mxu0 0.0
    %1126 = vmatprep.subr.mxu0 0.0
    %1127 = vmatpush1.msra.mxu0 0.0
    %1128 = vmatprep.subr.mxu0 0.0
    %1129 = vmatpush1.msra.mxu0 0.0
    %1130 = vmatprep.subr.mxu0 0.0
    %1131 = vmatpush1.msra.mxu0 0.0
    %1132 = vmatprep.subr.mxu0 0.0
    %1133 = vmatpush1.msra.mxu0 0.0
    %1134 = vmatprep.subr.mxu0 0.0
    %1135 = vmatpush1.msra.mxu0 0.0
    %1136 = vmatprep.subr.mxu0 0.0
    %1137 = vmatpush1.msra.mxu0 0.0
    %1138 = vmatprep.subr.mxu0 0.0
    %1139 = vmatpush1.msra.mxu0 0.0
    %1140 = vmatprep.subr.mxu0 0.0
    %1141 = vmatpush1.msra.mxu0 0.0
    %1142 = vmatprep.subr.mxu0 0.0
    %1143 = vmatpush1.msra.mxu0 0.0
    %1144 = vmatprep.subr.mxu0 0.0
    %1145 = vmatpush1.msra.mxu0 0.0
    %1146 = vmatprep.subr.mxu0 0.0
    %1147 = vmatpush1.msra.mxu0 0.0
    %1148 = vmatprep.subr.mxu0 0.0
    %1149 = vmatpush1.msra.mxu0 0.0
    %1150 = vmatprep.subr.mxu0 0.0
    %1151 = vmatpush1.msra.mxu0 0.0
    %1152 = vmatprep.subr.mxu0 0.0
    %1153 = vmatpush1.msra.mxu0 0.0
    %1154 = vmatprep.mubr.f32.mxu0 0.0
    %1155 = vmatmul.mubr.f32.gmra.mrb[0].mxu0 %v1018
    %v1156 = vpop.f32.mrb[0].mxu0
    %v1157 = vadd.f32 %v1087, %v1156
    %v1158 = vpop.f32.mrb[0].mxu0
    %1159 = vdwg.mxu0
    %1160 = vst [vmem:[#allocation8] sm:$0xff] %v1157
    // Predicated region
    $region22: #{tpu_custom_call.1} parent=1 // pred_check
      _
    $region23: #{tpu_custom_call.1} parent=1 // pred_check_branch
      %1162 = sbr.rel (0) target = $region25
    $region24: #{tpu_custom_call.1} parent=1 // pred_region
      %s1164 = ssub.s32 128, 128
      %1165 = vsyncadd [#allocation5], %s1164
      %s1167 = sshll.u32 [#allocation8], 4
      %s1168 = int_to_ptr.vmem [resolvable:$true] %s1167
      %1170 = dma.vmem_to_hbm [thread:$0]  %s1168, 128, %s3, [#allocation5]
    $region25: #{tpu_custom_call.1} parent=1 // pred_fallthru
      _
    // Predicated region
    $region26: #{tpu_custom_call.1} parent=1 // pred_check
      _
    $region27: #{tpu_custom_call.1} parent=1 // pred_check_branch
      %1172 = sbr.rel (0) target = $region29
    $region28: #{tpu_custom_call.1} parent=1 // pred_region
      %1173 = dma.done [#allocation5], 128
    $region29: #{tpu_custom_call.1} parent=1 // pred_fallthru
      _
    %1174 = vsyncpa [#allocation4], 1
    %1175 = vsyncpa [#allocation7], 1
    %1176 = vsyncpa [#allocation5], 1

</llo_original>
